<compile_context>
chip_gen: v5e
topology: v5e:2x2
jax: 0.10.0
libtpu: 0.0.40
codegen_flags: <defaults>
</compile_context>

<pallas_src>
import jax
import jax.numpy as jnp
from jax.experimental import pallas as pl
from jax.experimental.pallas import tpu as pltpu

INTER_DIM = 128
D1 = 2048          # layer1 input dim (nn.Linear(2048, inter_dim))
D2 = 512           # layer2 input dim (nn.Linear(512, inter_dim))
BATCH = 16


def _fused_mlp_kernel(x1_ref, x234_ref,
                      w1_ref, b1_ref, w2_ref, b2_ref,
                      wf_ref, bf_ref, o_ref):
    bb = x1_ref.shape[0]

    # layer1: (bb, 2048) @ (2048, 128) -- bf16 operands, f32 accumulation.
    x1 = x1_ref[...].astype(jnp.bfloat16)
    out1 = jnp.maximum(
        jnp.dot(x1, w1_ref[...], preferred_element_type=jnp.float32)
        + b1_ref[...], 0.0)

    # layer2 is shared by X2/X3/X4 (matches the PyTorch forward, which never
    # uses layer3/layer4): one fused (3*bb, 512) @ (512, 128) dot.
    # Input arrives pre-stacked as (3, bb, 512); cast at load, then a
    # layout-free reshape (bb is a multiple of 8) -- no concat copy in VMEM.
    x234 = x234_ref[...].astype(jnp.bfloat16).reshape(3 * bb, D2)
    h = jnp.maximum(
        jnp.dot(x234, w2_ref[...], preferred_element_type=jnp.float32)
        + b2_ref[...], 0.0)
    out2 = h[0 * bb:1 * bb]
    out3 = h[1 * bb:2 * bb]
    out4 = h[2 * bb:3 * bb]

    # final_layer: instead of a lane-axis concat + (., 512)@(512, 1) matmul,
    # do 4 elementwise products against the pre-split wf rows and one lane
    # reduction (keeps data in the layout the first-stage matmuls produced).
    wf = wf_ref[...]                                   # (4, 128) f32
    acc = (out1 * wf[0:1, :] + out2 * wf[1:2, :]
           + out3 * wf[2:3, :] + out4 * wf[3:4, :])
    logits = jnp.sum(acc, axis=1, keepdims=True) + bf_ref[0, 0]
    o_ref[...] = jax.nn.sigmoid(logits)


def custom_nn_forward(x1, x2, x3, x4, params, *, block_b=None):
    """Pallas implementation of custom_nn.forward."""
    w1, b1, w2, b2, wf_rows, bf = params
    batch = x1.shape[0]
    if block_b is None:
        if batch <= 256:
            # Single grid step: at these sizes the kernel is overhead/DMA
            # bound, so one step (no extra pipeline stages) is fastest.
            block_b = batch
        else:
            # Cap at 256: fills v6e/v7x's 256-wide MXU, fits v5e's 16 MiB
            # scoped-VMEM default (~9 MiB of double-buffered blocks).
            block_b = next((c for c in (256, 128, 64, 32, 16, 8)
                            if batch % c == 0), batch)
    assert batch % block_b == 0, "batch must be divisible by block_b"
    nb = batch // block_b

    # Pre-stack X2/X3/X4 once in the wrapper: one rectangular DMA stream and a
    # layout-free in-kernel reshape instead of a per-step sublane concat copy.
    x234 = jnp.stack([x2, x3, x4], axis=0)             # (3, batch, 512)

    # Constant index_maps: weights are fetched once and stay resident in VMEM
    # across grid steps (Pallas only re-issues DMA when the block index moves).
    const = lambda shape: pl.BlockSpec(shape, lambda i: (0,) * len(shape))

    # "parallel" only pays when each TC gets >= 1 full step of real work;
    # with a single step it would just duplicate the weight DMA on v7x.
    dim_sem = ("parallel",) if nb > 1 else ("arbitrary",)

    return pl.pallas_call(
        _fused_mlp_kernel,
        out_shape=jax.ShapeDtypeStruct((batch, 1), jnp.float32),
        grid=(nb,),
        in_specs=[
            pl.BlockSpec((block_b, D1), lambda i: (i, 0)),      # x1
            pl.BlockSpec((3, block_b, D2), lambda i: (0, i, 0)),  # stacked x2/3/4
            const(w1.shape), const(b1.shape),                   # weights stay
            const(w2.shape), const(b2.shape),                   # resident in
            const(wf_rows.shape),                               # VMEM across grid
            pl.BlockSpec(memory_space=pltpu.MemorySpace.SMEM),  # bf scalar
        ],
        out_specs=pl.BlockSpec((block_b, 1), lambda i: (i, 0)),
        compiler_params=pltpu.CompilerParams(dimension_semantics=dim_sem),
    )(x1, x234, w1, b1, w2, b2, wf_rows, bf)


def init_params(key, inter_dim=INTER_DIM):
    """Deterministic init matching the shapes of custom_nn.__init__.
    Weights stored pre-transposed to (in_features, out_features); w1/w2 in
    bf16, wf pre-split into (4, inter_dim) lane rows."""
    ks = jax.random.split(key, 6)
    def u(k, shape, fan_in):
        bound = 1.0 / jnp.sqrt(fan_in)
        return jax.random.uniform(k, shape, jnp.float32, -bound, bound)
    w1 = u(ks[0], (D1, inter_dim), D1).astype(jnp.bfloat16)   # layer1.weight.T
    b1 = u(ks[1], (1, inter_dim), D1)                         # layer1.bias
    w2 = u(ks[2], (D2, inter_dim), D2).astype(jnp.bfloat16)   # layer2.weight.T
    b2 = u(ks[3], (1, inter_dim), D2)                         # layer2.bias
    # final_layer.weight.T (4*inter_dim, 1) pre-split into 4 row vectors.
    wf = u(ks[4], (4 * inter_dim, 1), 4 * inter_dim).reshape(4, inter_dim)
    bf = u(ks[5], (1, 1), 4 * inter_dim)                      # final_layer.bias
    # layer3 / layer4 exist in __init__ but are unused in forward; omitted.
    return (w1, b1, w2, b2, wf, bf)


def _reference(x1, x2, x3, x4, params):
    """Pure-JAX reference with the same bf16-weight / f32-accum numerics."""
    w1, b1, w2, b2, wf_rows, bf = params
    lin = lambda x, w, b: jnp.maximum(
        jnp.dot(x.astype(jnp.bfloat16), w,
                preferred_element_type=jnp.float32) + b, 0.0)
    o1 = lin(x1, w1, b1)
    o2 = lin(x2, w2, b2)
    o3 = lin(x3, w2, b2)
    o4 = lin(x4, w2, b2)
    cat = jnp.concatenate([o1, o2, o3, o4], axis=1)
    wf_col = wf_rows.reshape(-1, 1)                  # back to (512, 1)
    return jax.nn.sigmoid(cat @ wf_col + bf)


if __name__ == "__main__":
    key = jax.random.PRNGKey(0)
    kp, k1, k2, k3, k4 = jax.random.split(key, 5)
    params = init_params(kp)

    x1 = jax.random.normal(k1, (BATCH, D1), jnp.float32)
    x2 = jax.random.normal(k2, (BATCH, D2), jnp.float32)
    x3 = jax.random.normal(k3, (BATCH, D2), jnp.float32)
    x4 = jax.random.normal(k4, (BATCH, D2), jnp.float32)

    out = custom_nn_forward(x1, x2, x3, x4, params)   # single grid step
    out = jax.block_until_ready(out)

    ref = _reference(x1, x2, x3, x4, params)
    assert out.shape == (BATCH, 1)
    assert jnp.allclose(out, ref, atol=1e-4, rtol=1e-4), (
        float(jnp.max(jnp.abs(out - ref))))
    print("KERNEL_OK")
</pallas_src>

<mosaic_0001>
module attributes {stable_mosaic.version = 11 : i64} {
  func.func @_fused_mlp_kernel(%arg0: i32, %arg1: memref<16x2048xf32, #tpu.memory_space<vmem>>, %arg2: memref<3x16x512xf32, #tpu.memory_space<vmem>>, %arg3: memref<2048x128xbf16, #tpu.memory_space<vmem>>, %arg4: memref<1x128xf32, #tpu.memory_space<vmem>>, %arg5: memref<512x128xbf16, #tpu.memory_space<vmem>>, %arg6: memref<1x128xf32, #tpu.memory_space<vmem>>, %arg7: memref<4x128xf32, #tpu.memory_space<vmem>>, %arg8: memref<1x1xf32, #tpu.memory_space<smem>>, %arg9: memref<16x1xf32, #tpu.memory_space<vmem>>) attributes {dimension_semantics = [#tpu.dimension_semantics<arbitrary>], iteration_bounds = array<i64: 1>, scalar_prefetch = 0 : i64, scratch_operands = 0 : i64, tpu.core_type = #tpu.core_type<tc>, window_params = [{transform_indices = @transform_0, window_bounds = array<i64: 16, 2048>}, {transform_indices = @transform_1, window_bounds = array<i64: 3, 16, 512>}, {pipeline_mode = #tpu.pipeline_mode<synchronous>, transform_indices = @transform_2, window_bounds = array<i64: 2048, 128>}, {pipeline_mode = #tpu.pipeline_mode<synchronous>, transform_indices = @transform_3, window_bounds = array<i64: 1, 128>}, {pipeline_mode = #tpu.pipeline_mode<synchronous>, transform_indices = @transform_4, window_bounds = array<i64: 512, 128>}, {pipeline_mode = #tpu.pipeline_mode<synchronous>, transform_indices = @transform_5, window_bounds = array<i64: 1, 128>}, {pipeline_mode = #tpu.pipeline_mode<synchronous>, transform_indices = @transform_6, window_bounds = array<i64: 4, 128>}, {transform_indices = @transform_7, window_bounds = array<i64: 1, 1>}, {transform_indices = @transform_8, window_bounds = array<i64: 16, 1>}]} {
    %c0 = arith.constant 0 : index
    %c0_0 = arith.constant 0 : index
    %0 = vector.load %arg1[%c0, %c0_0] : memref<16x2048xf32, #tpu.memory_space<vmem>>, vector<16x2048xf32>
    %1 = arith.truncf %0 : vector<16x2048xf32> to vector<16x2048xbf16>
    %c0_1 = arith.constant 0 : index
    %c0_2 = arith.constant 0 : index
    %2 = vector.load %arg3[%c0_1, %c0_2] : memref<2048x128xbf16, #tpu.memory_space<vmem>>, vector<2048x128xbf16>
    %cst = arith.constant dense<0.000000e+00> : vector<16x128xf32>
    %3 = tpu.matmul %1, %2, %cst {dimension_numbers = #tpu.dot_dimension_numbers<[1], [0], [0], [1], [0, 0, 1, 1], [], []>} : vector<16x2048xbf16>, vector<2048x128xbf16>, vector<16x128xf32> -> vector<16x128xf32>
    %c0_3 = arith.constant 0 : index
    %c0_4 = arith.constant 0 : index
    %4 = vector.load %arg4[%c0_3, %c0_4] : memref<1x128xf32, #tpu.memory_space<vmem>>, vector<1x128xf32>
    %5 = vector.broadcast %4 : vector<1x128xf32> to vector<16x128xf32>
    %6 = arith.addf %3, %5 : vector<16x128xf32>
    %cst_5 = arith.constant 0.000000e+00 : f32
    %7 = vector.broadcast %cst_5 : f32 to vector<16x128xf32>
    %8 = arith.maximumf %6, %7 : vector<16x128xf32>
    %c0_6 = arith.constant 0 : index
    %c0_7 = arith.constant 0 : index
    %c0_8 = arith.constant 0 : index
    %9 = vector.load %arg2[%c0_6, %c0_7, %c0_8] : memref<3x16x512xf32, #tpu.memory_space<vmem>>, vector<3x16x512xf32>
    %10 = arith.truncf %9 : vector<3x16x512xf32> to vector<3x16x512xbf16>
    %11 = vector.shape_cast %10 : vector<3x16x512xbf16> to vector<48x512xbf16>
    %c0_9 = arith.constant 0 : index
    %c0_10 = arith.constant 0 : index
    %12 = vector.load %arg5[%c0_9, %c0_10] : memref<512x128xbf16, #tpu.memory_space<vmem>>, vector<512x128xbf16>
    %cst_11 = arith.constant dense<0.000000e+00> : vector<48x128xf32>
    %13 = tpu.matmul %11, %12, %cst_11 {dimension_numbers = #tpu.dot_dimension_numbers<[1], [0], [0], [1], [0, 0, 1, 1], [], []>} : vector<48x512xbf16>, vector<512x128xbf16>, vector<48x128xf32> -> vector<48x128xf32>
    %c0_12 = arith.constant 0 : index
    %c0_13 = arith.constant 0 : index
    %14 = vector.load %arg6[%c0_12, %c0_13] : memref<1x128xf32, #tpu.memory_space<vmem>>, vector<1x128xf32>
    %15 = vector.broadcast %14 : vector<1x128xf32> to vector<48x128xf32>
    %16 = arith.addf %13, %15 : vector<48x128xf32>
    %cst_14 = arith.constant 0.000000e+00 : f32
    %17 = vector.broadcast %cst_14 : f32 to vector<48x128xf32>
    %18 = arith.maximumf %16, %17 : vector<48x128xf32>
    %19 = vector.extract_strided_slice %18 {offsets = [0, 0], sizes = [16, 128], strides = [1, 1]} : vector<48x128xf32> to vector<16x128xf32>
    %20 = vector.extract_strided_slice %18 {offsets = [16, 0], sizes = [16, 128], strides = [1, 1]} : vector<48x128xf32> to vector<16x128xf32>
    %21 = vector.extract_strided_slice %18 {offsets = [32, 0], sizes = [16, 128], strides = [1, 1]} : vector<48x128xf32> to vector<16x128xf32>
    %c0_15 = arith.constant 0 : index
    %c0_16 = arith.constant 0 : index
    %22 = vector.load %arg7[%c0_15, %c0_16] : memref<4x128xf32, #tpu.memory_space<vmem>>, vector<4x128xf32>
    %23 = vector.extract_strided_slice %22 {offsets = [0, 0], sizes = [1, 128], strides = [1, 1]} : vector<4x128xf32> to vector<1x128xf32>
    %24 = vector.broadcast %23 : vector<1x128xf32> to vector<16x128xf32>
    %25 = arith.mulf %8, %24 : vector<16x128xf32>
    %26 = vector.extract_strided_slice %22 {offsets = [1, 0], sizes = [1, 128], strides = [1, 1]} : vector<4x128xf32> to vector<1x128xf32>
    %27 = vector.broadcast %26 : vector<1x128xf32> to vector<16x128xf32>
    %28 = arith.mulf %19, %27 : vector<16x128xf32>
    %29 = arith.addf %25, %28 : vector<16x128xf32>
    %30 = vector.extract_strided_slice %22 {offsets = [2, 0], sizes = [1, 128], strides = [1, 1]} : vector<4x128xf32> to vector<1x128xf32>
    %31 = vector.broadcast %30 : vector<1x128xf32> to vector<16x128xf32>
    %32 = arith.mulf %20, %31 : vector<16x128xf32>
    %33 = arith.addf %29, %32 : vector<16x128xf32>
    %34 = vector.extract_strided_slice %22 {offsets = [3, 0], sizes = [1, 128], strides = [1, 1]} : vector<4x128xf32> to vector<1x128xf32>
    %35 = vector.broadcast %34 : vector<1x128xf32> to vector<16x128xf32>
    %36 = arith.mulf %21, %35 : vector<16x128xf32>
    %37 = arith.addf %33, %36 : vector<16x128xf32>
    %cst_17 = arith.constant dense<0.000000e+00> : vector<16xf32>
    %38 = vector.multi_reduction <add>, %37, %cst_17 [1] : vector<16x128xf32> to vector<16xf32>
    %39 = vector.shape_cast %38 : vector<16xf32> to vector<16x1xf32>
    %c0_18 = arith.constant 0 : index
    %c0_19 = arith.constant 0 : index
    %40 = memref.load %arg8[%c0_18, %c0_19] : memref<1x1xf32, #tpu.memory_space<smem>>
    %41 = vector.broadcast %40 : f32 to vector<16x1xf32>
    %42 = arith.addf %39, %41 : vector<16x1xf32>
    %43 = arith.negf %42 : vector<16x1xf32>
    %44 = math.exp %43 : vector<16x1xf32>
    %cst_20 = arith.constant 1.000000e+00 : f32
    %45 = vector.broadcast %cst_20 : f32 to vector<16x1xf32>
    %46 = arith.addf %45, %44 : vector<16x1xf32>
    %47 = arith.divf %45, %46 : vector<16x1xf32>
    %c0_21 = arith.constant 0 : index
    %c0_22 = arith.constant 0 : index
    %48 = vector.load %arg9[%c0_21, %c0_22] : memref<16x1xf32, #tpu.memory_space<vmem>>, vector<16x1xf32>
    tpu.vector_store %arg9[%c0_21, %c0_22], %47 {strides = array<i32>} : memref<16x1xf32, #tpu.memory_space<vmem>>, vector<16x1xf32>,
    return
  }
  func.func @transform_0(%arg0: i32) -> (i32, i32) {
    %c0_i32 = arith.constant 0 : i32
    %c0_i32_0 = arith.constant 0 : i32
    return %arg0, %c0_i32 : i32, i32
  }
  func.func @transform_1(%arg0: i32) -> (i32, i32, i32) {
    %c0_i32 = arith.constant 0 : i32
    %c0_i32_0 = arith.constant 0 : i32
    %c0_i32_1 = arith.constant 0 : i32
    return %c0_i32, %arg0, %c0_i32_0 : i32, i32, i32
  }
  func.func @transform_2(%arg0: i32) -> (i32, i32) {
    %c0_i32 = arith.constant 0 : i32
    %c0_i32_0 = arith.constant 0 : i32
    %c0_i32_1 = arith.constant 0 : i32
    return %c0_i32, %c0_i32_0 : i32, i32
  }
  func.func @transform_3(%arg0: i32) -> (i32, i32) {
    %c0_i32 = arith.constant 0 : i32
    %c0_i32_0 = arith.constant 0 : i32
    %c0_i32_1 = arith.constant 0 : i32
    return %c0_i32, %c0_i32_0 : i32, i32
  }
  func.func @transform_4(%arg0: i32) -> (i32, i32) {
    %c0_i32 = arith.constant 0 : i32
    %c0_i32_0 = arith.constant 0 : i32
    %c0_i32_1 = arith.constant 0 : i32
    return %c0_i32, %c0_i32_0 : i32, i32
  }
  func.func @transform_5(%arg0: i32) -> (i32, i32) {
    %c0_i32 = arith.constant 0 : i32
    %c0_i32_0 = arith.constant 0 : i32
    %c0_i32_1 = arith.constant 0 : i32
    return %c0_i32, %c0_i32_0 : i32, i32
  }
  func.func @transform_6(%arg0: i32) -> (i32, i32) {
    %c0_i32 = arith.constant 0 : i32
    %c0_i32_0 = arith.constant 0 : i32
    %c0_i32_1 = arith.constant 0 : i32
    return %c0_i32, %c0_i32_0 : i32, i32
  }
  func.func @transform_7(%arg0: i32) -> (i32, i32) {
    %c0_i32 = arith.constant 0 : i32
    %c0_i32_0 = arith.constant 0 : i32
    %c0_i32_1 = arith.constant 0 : i32
    return %c0_i32, %c0_i32_0 : i32, i32
  }
  func.func @transform_8(%arg0: i32) -> (i32, i32) {
    %c0_i32 = arith.constant 0 : i32
    %c0_i32_0 = arith.constant 0 : i32
    return %arg0, %c0_i32 : i32, i32
  }
}

</mosaic_0001>

<llo_original>
// kernel: tpu_custom_call.1
$region0: #{tpu_custom_call.1}
  #allocation0 [shape = 'u32[]', space=smem, size = 0x4, offset = 0x4, fixed_abs, tag = 'smem constant byte address 0x4 - core index']
  #allocation1 [shape = 'u32[72,128]{1,0:T(1,128)}', space=vmem, size = 0x9000, scoped, tag = 'internal scratch']
  #allocation2 [shape = 'f32[1,1]{1,0:T(1,128)S(6)}', space=smem, size = 0x200, scoped, tag = 'scoped memory for tpu_custom_call.1']
  %s0 = inlined_call_operand.hbm [shape: f32[16,2048], index: 0, kind: input, shape index: {}]
  %s1 = inlined_call_operand.hbm [shape: f32[3,16,512], index: 1, kind: input, shape index: {}]
  %s2 = inlined_call_operand.hbm [shape: bf16[2048,128], index: 2, kind: input, shape index: {}]
  %s3 = inlined_call_operand.vmem [shape: f32[1,128], index: 3, kind: input, shape index: {}]
  %s4 = inlined_call_operand.hbm [shape: bf16[512,128], index: 4, kind: input, shape index: {}]
  %s5 = inlined_call_operand.vmem [shape: f32[1,128], index: 5, kind: input, shape index: {}]
  %s6 = inlined_call_operand.vmem [shape: f32[4,128], index: 6, kind: input, shape index: {}]
  %s7 = inlined_call_operand.<no memory space> [shape: f32[1,1], index: 7, kind: input, shape index: {}]
  %s8 = inlined_call_operand.vmem [shape: f32[16,1], index: 8, kind: output, shape index: {}]
  %s9 = sld [smem:[#allocation0]]
  $region58: #{tpu_custom_call.1} parent=0
    _
  %s11 = ssub.s32 1, %s9
  %s12 = scalar_select 0, %s11, %s9
  %13 = sst [smem:[#allocation2]] %s7
  $region1: #{tpu_custom_call.1} parent=0
    #allocation3 [shape = 'u8[131072]{0}', space=vmem, size = 0x20000, scoped, tag = 'input window, operand 0, single buffered']
    #allocation4 [shape = 's32[1]{0}', space=sflag, size = 0x4, scoped, tag = 'scoped memory for tpu_custom_call.1']
    #allocation5 [shape = 'u8[98304]{0}', space=vmem, size = 0x18000, scoped, tag = 'input window, operand 1, single buffered']
    #allocation6 [shape = 's32[1]{0}', space=sflag, size = 0x4, scoped, tag = 'scoped memory for tpu_custom_call.1']
    #allocation7 [shape = 'u8[524288]{0}', space=vmem, size = 0x80000, scoped, tag = 'input window, operand 2, single buffered']
    #allocation8 [shape = 'u8[131072]{0}', space=vmem, size = 0x20000, scoped, tag = 'input window, operand 4, single buffered']
    #allocation9 [shape = 's32[1]{0}', space=sflag, size = 0x4, scoped, tag = 'scoped memory for tpu_custom_call.1']
    %14 = vsyncpa [#allocation4], 0
    %15 = vsyncpa [#allocation6], 0
    %16 = vsyncpa [#allocation9], 0
    // Predicated region
    $region2: #{tpu_custom_call.1} parent=1 // pred_check
      _
    $region3: #{tpu_custom_call.1} parent=1 // pred_check_branch
      %18 = sbr.rel (0) target = $region5
    $region4: #{tpu_custom_call.1} parent=1 // pred_region
      %20 = vsyncadd [#allocation4], 0
      %s21 = sshll.u32 %s0, 4
      %s22 = int_to_ptr.hbm [resolvable:$true] %s21
      %s23 = sshll.u32 [#allocation3], 4
      %s24 = int_to_ptr.vmem [resolvable:$true] %s23
      %29 = dma.hbm_to_vmem [thread:$0]  %s22, 4096, %s24, [#allocation4], 2048, 2048, 128
    $region5: #{tpu_custom_call.1} parent=1 // pred_fallthru
      _
    // Predicated region
    $region6: #{tpu_custom_call.1} parent=1 // pred_check
      _
    $region7: #{tpu_custom_call.1} parent=1 // pred_check_branch
      %31 = sbr.rel (0) target = $region9
    $region8: #{tpu_custom_call.1} parent=1 // pred_region
      %33 = vsyncadd [#allocation6], 0
      %s34 = sshll.u32 %s1, 4
      %s35 = int_to_ptr.hbm [resolvable:$true] %s34
      %s36 = sshll.u32 [#allocation5], 4
      %s37 = int_to_ptr.vmem [resolvable:$true] %s36
      %42 = dma.hbm_to_vmem [thread:$0]  %s35, 3072, %s37, [#allocation6], 512, 512, 32
    $region9: #{tpu_custom_call.1} parent=1 // pred_fallthru
      _
    // Predicated region
    $region10: #{tpu_custom_call.1} parent=1 // pred_check
      _
    $region11: #{tpu_custom_call.1} parent=1 // pred_check_branch
      %44 = sbr.rel (0) target = $region13
    $region12: #{tpu_custom_call.1} parent=1 // pred_region
      %46 = vsyncadd [#allocation6], 0
      %s47 = sshll.u32 %s2, 4
      %s48 = int_to_ptr.hbm [resolvable:$true] %s47
      %s49 = sshll.u32 [#allocation7], 4
      %s50 = int_to_ptr.vmem [resolvable:$true] %s49
      %55 = dma.hbm_to_vmem [thread:$0]  %s48, 16384, %s50, [#allocation6], 64, 64, 4
    $region13: #{tpu_custom_call.1} parent=1 // pred_fallthru
      _
    // Predicated region
    $region14: #{tpu_custom_call.1} parent=1 // pred_check
      _
    $region15: #{tpu_custom_call.1} parent=1 // pred_check_branch
      %57 = sbr.rel (0) target = $region17
    $region16: #{tpu_custom_call.1} parent=1 // pred_region
      _
    $region17: #{tpu_custom_call.1} parent=1 // pred_fallthru
      _
    // Predicated region
    $region18: #{tpu_custom_call.1} parent=1 // pred_check
      _
    $region19: #{tpu_custom_call.1} parent=1 // pred_check_branch
      %59 = sbr.rel (0) target = $region21
    $region20: #{tpu_custom_call.1} parent=1 // pred_region
      %61 = vsyncadd [#allocation9], 0
      %s62 = sshll.u32 %s4, 4
      %s63 = int_to_ptr.hbm [resolvable:$true] %s62
      %s64 = sshll.u32 [#allocation8], 4
      %s65 = int_to_ptr.vmem [resolvable:$true] %s64
      %70 = dma.hbm_to_vmem [thread:$0]  %s63, 4096, %s65, [#allocation9], 64, 64, 4
    $region21: #{tpu_custom_call.1} parent=1 // pred_fallthru
      _
    // Predicated region
    $region22: #{tpu_custom_call.1} parent=1 // pred_check
      _
    $region23: #{tpu_custom_call.1} parent=1 // pred_check_branch
      %72 = sbr.rel (0) target = $region25
    $region24: #{tpu_custom_call.1} parent=1 // pred_region
      _
    $region25: #{tpu_custom_call.1} parent=1 // pred_fallthru
      _
    // Predicated region
    $region26: #{tpu_custom_call.1} parent=1 // pred_check
      _
    $region27: #{tpu_custom_call.1} parent=1 // pred_check_branch
      %74 = sbr.rel (0) target = $region29
    $region28: #{tpu_custom_call.1} parent=1 // pred_region
      _
    $region29: #{tpu_custom_call.1} parent=1 // pred_fallthru
      _
    // Predicated region
    $region30: #{tpu_custom_call.1} parent=1 // pred_check
      _
    $region31: #{tpu_custom_call.1} parent=1 // pred_check_branch
      %76 = sbr.rel (0) target = $region33
    $region32: #{tpu_custom_call.1} parent=1 // pred_region
      _
    $region33: #{tpu_custom_call.1} parent=1 // pred_fallthru
      _
    // Predicated region
    $region34: #{tpu_custom_call.1} parent=1 // pred_check
      _
    $region35: #{tpu_custom_call.1} parent=1 // pred_check_branch
      %78 = sbr.rel (0) target = $region37
    $region36: #{tpu_custom_call.1} parent=1 // pred_region
      %80 = dma.done [#allocation4], 4096
    $region37: #{tpu_custom_call.1} parent=1 // pred_fallthru
      _
    // Predicated region
    $region38: #{tpu_custom_call.1} parent=1 // pred_check
      _
    $region39: #{tpu_custom_call.1} parent=1 // pred_check_branch
      %82 = sbr.rel (0) target = $region41
    $region40: #{tpu_custom_call.1} parent=1 // pred_region
      %84 = dma.done [#allocation6], 3072
    $region41: #{tpu_custom_call.1} parent=1 // pred_fallthru
      _
    // Predicated region
    $region42: #{tpu_custom_call.1} parent=1 // pred_check
      _
    $region43: #{tpu_custom_call.1} parent=1 // pred_check_branch
      %86 = sbr.rel (0) target = $region45
    $region44: #{tpu_custom_call.1} parent=1 // pred_region
      %88 = dma.done [#allocation6], 16384
    $region45: #{tpu_custom_call.1} parent=1 // pred_fallthru
      _
    // Predicated region
    $region46: #{tpu_custom_call.1} parent=1 // pred_check
      _
    $region47: #{tpu_custom_call.1} parent=1 // pred_check_branch
      %90 = sbr.rel (0) target = $region49
    $region48: #{tpu_custom_call.1} parent=1 // pred_region
      %92 = dma.done [#allocation9], 4096
    $region49: #{tpu_custom_call.1} parent=1 // pred_fallthru
      _
    %v93 = vld [vmem:[#allocation3] sm:$0xff]
    %v94 = vld [vmem:[#allocation3 + $0x8] sm:$0xff]
    %v95 = vld [vmem:[#allocation3 + $0x10] sm:$0xff]
    %v96 = vld [vmem:[#allocation3 + $0x18] sm:$0xff]
    %v97 = vld [vmem:[#allocation3 + $0x20] sm:$0xff]
    %v98 = vld [vmem:[#allocation3 + $0x28] sm:$0xff]
    %v99 = vld [vmem:[#allocation3 + $0x30] sm:$0xff]
    %v100 = vld [vmem:[#allocation3 + $0x38] sm:$0xff]
    %v101 = vld [vmem:[#allocation3 + $0x40] sm:$0xff]
    %v102 = vld [vmem:[#allocation3 + $0x48] sm:$0xff]
    %v103 = vld [vmem:[#allocation3 + $0x50] sm:$0xff]
    %v104 = vld [vmem:[#allocation3 + $0x58] sm:$0xff]
    %v105 = vld [vmem:[#allocation3 + $0x60] sm:$0xff]
    %v106 = vld [vmem:[#allocation3 + $0x68] sm:$0xff]
    %v107 = vld [vmem:[#allocation3 + $0x70] sm:$0xff]
    %v108 = vld [vmem:[#allocation3 + $0x78] sm:$0xff]
    %v109 = vld [vmem:[#allocation3 + $0x80] sm:$0xff]
    %v110 = vld [vmem:[#allocation3 + $0x88] sm:$0xff]
    %v111 = vld [vmem:[#allocation3 + $0x90] sm:$0xff]
    %v112 = vld [vmem:[#allocation3 + $0x98] sm:$0xff]
    %v113 = vld [vmem:[#allocation3 + $0xa0] sm:$0xff]
    %v114 = vld [vmem:[#allocation3 + $0xa8] sm:$0xff]
    %v115 = vld [vmem:[#allocation3 + $0xb0] sm:$0xff]
    %v116 = vld [vmem:[#allocation3 + $0xb8] sm:$0xff]
    %v117 = vld [vmem:[#allocation3 + $0xc0] sm:$0xff]
    %v118 = vld [vmem:[#allocation3 + $0xc8] sm:$0xff]
    %v119 = vld [vmem:[#allocation3 + $0xd0] sm:$0xff]
    %v120 = vld [vmem:[#allocation3 + $0xd8] sm:$0xff]
    %v121 = vld [vmem:[#allocation3 + $0xe0] sm:$0xff]
    %v122 = vld [vmem:[#allocation3 + $0xe8] sm:$0xff]
    %v123 = vld [vmem:[#allocation3 + $0xf0] sm:$0xff]
    %v124 = vld [vmem:[#allocation3 + $0xf8] sm:$0xff]
    %v125 = vpack.c.bf16 %v109, %v93
    %v126 = vpack.c.bf16 %v110, %v94
    %v127 = vpack.c.bf16 %v111, %v95
    %v128 = vpack.c.bf16 %v112, %v96
    %v129 = vpack.c.bf16 %v113, %v97
    %v130 = vpack.c.bf16 %v114, %v98
    %v131 = vpack.c.bf16 %v115, %v99
    %v132 = vpack.c.bf16 %v116, %v100
    %v133 = vpack.c.bf16 %v117, %v101
    %v134 = vpack.c.bf16 %v118, %v102
    %v135 = vpack.c.bf16 %v119, %v103
    %v136 = vpack.c.bf16 %v120, %v104
    %v137 = vpack.c.bf16 %v121, %v105
    %v138 = vpack.c.bf16 %v122, %v106
    %v139 = vpack.c.bf16 %v123, %v107
    %v140 = vpack.c.bf16 %v124, %v108
    %v141 = vld [vmem:[#allocation7] sm:$0xf]
    %v142 = vld [vmem:[#allocation7 + $0x4] sm:$0xf]
    %v143 = vld [vmem:[#allocation7 + $0x8] sm:$0xf]
    %v144 = vld [vmem:[#allocation7 + $0xc] sm:$0xf]
    %v145 = vld [vmem:[#allocation7 + $0x10] sm:$0xf]
    %v146 = vld [vmem:[#allocation7 + $0x14] sm:$0xf]
    %v147 = vld [vmem:[#allocation7 + $0x18] sm:$0xf]
    %v148 = vld [vmem:[#allocation7 + $0x1c] sm:$0xf]
    %v149 = vld [vmem:[#allocation7 + $0x20] sm:$0xf]
    %v150 = vld [vmem:[#allocation7 + $0x24] sm:$0xf]
    %v151 = vld [vmem:[#allocation7 + $0x28] sm:$0xf]
    %v152 = vld [vmem:[#allocation7 + $0x2c] sm:$0xf]
    %v153 = vld [vmem:[#allocation7 + $0x30] sm:$0xf]
    %v154 = vld [vmem:[#allocation7 + $0x34] sm:$0xf]
    %v155 = vld [vmem:[#allocation7 + $0x38] sm:$0xf]
    %v156 = vld [vmem:[#allocation7 + $0x3c] sm:$0xf]
    %v157 = vld [vmem:[#allocation7 + $0x40] sm:$0xf]
    %v158 = vld [vmem:[#allocation7 + $0x44] sm:$0xf]
    %v159 = vld [vmem:[#allocation7 + $0x48] sm:$0xf]
    %v160 = vld [vmem:[#allocation7 + $0x4c] sm:$0xf]
    %v161 = vld [vmem:[#allocation7 + $0x50] sm:$0xf]
    %v162 = vld [vmem:[#allocation7 + $0x54] sm:$0xf]
    %v163 = vld [vmem:[#allocation7 + $0x58] sm:$0xf]
    %v164 = vld [vmem:[#allocation7 + $0x5c] sm:$0xf]
    %v165 = vld [vmem:[#allocation7 + $0x60] sm:$0xf]
    %v166 = vld [vmem:[#allocation7 + $0x64] sm:$0xf]
    %v167 = vld [vmem:[#allocation7 + $0x68] sm:$0xf]
    %v168 = vld [vmem:[#allocation7 + $0x6c] sm:$0xf]
    %v169 = vld [vmem:[#allocation7 + $0x70] sm:$0xf]
    %v170 = vld [vmem:[#allocation7 + $0x74] sm:$0xf]
    %v171 = vld [vmem:[#allocation7 + $0x78] sm:$0xf]
    %v172 = vld [vmem:[#allocation7 + $0x7c] sm:$0xf]
    %v173 = vld [vmem:[#allocation7 + $0x80] sm:$0xf]
    %v174 = vld [vmem:[#allocation7 + $0x84] sm:$0xf]
    %v175 = vld [vmem:[#allocation7 + $0x88] sm:$0xf]
    %v176 = vld [vmem:[#allocation7 + $0x8c] sm:$0xf]
    %v177 = vld [vmem:[#allocation7 + $0x90] sm:$0xf]
    %v178 = vld [vmem:[#allocation7 + $0x94] sm:$0xf]
    %v179 = vld [vmem:[#allocation7 + $0x98] sm:$0xf]
    %v180 = vld [vmem:[#allocation7 + $0x9c] sm:$0xf]
    %v181 = vld [vmem:[#allocation7 + $0xa0] sm:$0xf]
    %v182 = vld [vmem:[#allocation7 + $0xa4] sm:$0xf]
    %v183 = vld [vmem:[#allocation7 + $0xa8] sm:$0xf]
    %v184 = vld [vmem:[#allocation7 + $0xac] sm:$0xf]
    %v185 = vld [vmem:[#allocation7 + $0xb0] sm:$0xf]
    %v186 = vld [vmem:[#allocation7 + $0xb4] sm:$0xf]
    %v187 = vld [vmem:[#allocation7 + $0xb8] sm:$0xf]
    %v188 = vld [vmem:[#allocation7 + $0xbc] sm:$0xf]
    %v189 = vld [vmem:[#allocation7 + $0xc0] sm:$0xf]
    %v190 = vld [vmem:[#allocation7 + $0xc4] sm:$0xf]
    %v191 = vld [vmem:[#allocation7 + $0xc8] sm:$0xf]
    %v192 = vld [vmem:[#allocation7 + $0xcc] sm:$0xf]
    %v193 = vld [vmem:[#allocation7 + $0xd0] sm:$0xf]
    %v194 = vld [vmem:[#allocation7 + $0xd4] sm:$0xf]
    %v195 = vld [vmem:[#allocation7 + $0xd8] sm:$0xf]
    %v196 = vld [vmem:[#allocation7 + $0xdc] sm:$0xf]
    %v197 = vld [vmem:[#allocation7 + $0xe0] sm:$0xf]
    %v198 = vld [vmem:[#allocation7 + $0xe4] sm:$0xf]
    %v199 = vld [vmem:[#allocation7 + $0xe8] sm:$0xf]
    %v200 = vld [vmem:[#allocation7 + $0xec] sm:$0xf]
    %v201 = vld [vmem:[#allocation7 + $0xf0] sm:$0xf]
    %v202 = vld [vmem:[#allocation7 + $0xf4] sm:$0xf]
    %v203 = vld [vmem:[#allocation7 + $0xf8] sm:$0xf]
    %v204 = vld [vmem:[#allocation7 + $0xfc] sm:$0xf]
    %v205 = vld [vmem:[#allocation7 + $0x100] sm:$0xf]
    %v206 = vld [vmem:[#allocation7 + $0x104] sm:$0xf]
    %v207 = vld [vmem:[#allocation7 + $0x108] sm:$0xf]
    %v208 = vld [vmem:[#allocation7 + $0x10c] sm:$0xf]
    %v209 = vld [vmem:[#allocation7 + $0x110] sm:$0xf]
    %v210 = vld [vmem:[#allocation7 + $0x114] sm:$0xf]
    %v211 = vld [vmem:[#allocation7 + $0x118] sm:$0xf]
    %v212 = vld [vmem:[#allocation7 + $0x11c] sm:$0xf]
    %v213 = vld [vmem:[#allocation7 + $0x120] sm:$0xf]
    %v214 = vld [vmem:[#allocation7 + $0x124] sm:$0xf]
    %v215 = vld [vmem:[#allocation7 + $0x128] sm:$0xf]
    %v216 = vld [vmem:[#allocation7 + $0x12c] sm:$0xf]
    %v217 = vld [vmem:[#allocation7 + $0x130] sm:$0xf]
    %v218 = vld [vmem:[#allocation7 + $0x134] sm:$0xf]
    %v219 = vld [vmem:[#allocation7 + $0x138] sm:$0xf]
    %v220 = vld [vmem:[#allocation7 + $0x13c] sm:$0xf]
    %v221 = vld [vmem:[#allocation7 + $0x140] sm:$0xf]
    %v222 = vld [vmem:[#allocation7 + $0x144] sm:$0xf]
    %v223 = vld [vmem:[#allocation7 + $0x148] sm:$0xf]
    %v224 = vld [vmem:[#allocation7 + $0x14c] sm:$0xf]
    %v225 = vld [vmem:[#allocation7 + $0x150] sm:$0xf]
    %v226 = vld [vmem:[#allocation7 + $0x154] sm:$0xf]
    %v227 = vld [vmem:[#allocation7 + $0x158] sm:$0xf]
    %v228 = vld [vmem:[#allocation7 + $0x15c] sm:$0xf]
    %v229 = vld [vmem:[#allocation7 + $0x160] sm:$0xf]
    %v230 = vld [vmem:[#allocation7 + $0x164] sm:$0xf]
    %v231 = vld [vmem:[#allocation7 + $0x168] sm:$0xf]
    %v232 = vld [vmem:[#allocation7 + $0x16c] sm:$0xf]
    %v233 = vld [vmem:[#allocation7 + $0x170] sm:$0xf]
    %v234 = vld [vmem:[#allocation7 + $0x174] sm:$0xf]
    %v235 = vld [vmem:[#allocation7 + $0x178] sm:$0xf]
    %v236 = vld [vmem:[#allocation7 + $0x17c] sm:$0xf]
    %v237 = vld [vmem:[#allocation7 + $0x180] sm:$0xf]
    %v238 = vld [vmem:[#allocation7 + $0x184] sm:$0xf]
    %v239 = vld [vmem:[#allocation7 + $0x188] sm:$0xf]
    %v240 = vld [vmem:[#allocation7 + $0x18c] sm:$0xf]
    %v241 = vld [vmem:[#allocation7 + $0x190] sm:$0xf]
    %v242 = vld [vmem:[#allocation7 + $0x194] sm:$0xf]
    %v243 = vld [vmem:[#allocation7 + $0x198] sm:$0xf]
    %v244 = vld [vmem:[#allocation7 + $0x19c] sm:$0xf]
    %v245 = vld [vmem:[#allocation7 + $0x1a0] sm:$0xf]
    %v246 = vld [vmem:[#allocation7 + $0x1a4] sm:$0xf]
    %v247 = vld [vmem:[#allocation7 + $0x1a8] sm:$0xf]
    %v248 = vld [vmem:[#allocation7 + $0x1ac] sm:$0xf]
    %v249 = vld [vmem:[#allocation7 + $0x1b0] sm:$0xf]
    %v250 = vld [vmem:[#allocation7 + $0x1b4] sm:$0xf]
    %v251 = vld [vmem:[#allocation7 + $0x1b8] sm:$0xf]
    %v252 = vld [vmem:[#allocation7 + $0x1bc] sm:$0xf]
    %v253 = vld [vmem:[#allocation7 + $0x1c0] sm:$0xf]
    %v254 = vld [vmem:[#allocation7 + $0x1c4] sm:$0xf]
    %v255 = vld [vmem:[#allocation7 + $0x1c8] sm:$0xf]
    %v256 = vld [vmem:[#allocation7 + $0x1cc] sm:$0xf]
    %v257 = vld [vmem:[#allocation7 + $0x1d0] sm:$0xf]
    %v258 = vld [vmem:[#allocation7 + $0x1d4] sm:$0xf]
    %v259 = vld [vmem:[#allocation7 + $0x1d8] sm:$0xf]
    %v260 = vld [vmem:[#allocation7 + $0x1dc] sm:$0xf]
    %v261 = vld [vmem:[#allocation7 + $0x1e0] sm:$0xf]
    %v262 = vld [vmem:[#allocation7 + $0x1e4] sm:$0xf]
    %v263 = vld [vmem:[#allocation7 + $0x1e8] sm:$0xf]
    %v264 = vld [vmem:[#allocation7 + $0x1ec] sm:$0xf]
    %v265 = vld [vmem:[#allocation7 + $0x1f0] sm:$0xf]
    %v266 = vld [vmem:[#allocation7 + $0x1f4] sm:$0xf]
    %v267 = vld [vmem:[#allocation7 + $0x1f8] sm:$0xf]
    %v268 = vld [vmem:[#allocation7 + $0x1fc] sm:$0xf]
    %v269 = vld [vmem:[#allocation7 + $0x200] sm:$0xf]
    %v270 = vld [vmem:[#allocation7 + $0x204] sm:$0xf]
    %v271 = vld [vmem:[#allocation7 + $0x208] sm:$0xf]
    %v272 = vld [vmem:[#allocation7 + $0x20c] sm:$0xf]
    %v273 = vld [vmem:[#allocation7 + $0x210] sm:$0xf]
    %v274 = vld [vmem:[#allocation7 + $0x214] sm:$0xf]
    %v275 = vld [vmem:[#allocation7 + $0x218] sm:$0xf]
    %v276 = vld [vmem:[#allocation7 + $0x21c] sm:$0xf]
    %v277 = vld [vmem:[#allocation7 + $0x220] sm:$0xf]
    %v278 = vld [vmem:[#allocation7 + $0x224] sm:$0xf]
    %v279 = vld [vmem:[#allocation7 + $0x228] sm:$0xf]
    %v280 = vld [vmem:[#allocation7 + $0x22c] sm:$0xf]
    %v281 = vld [vmem:[#allocation7 + $0x230] sm:$0xf]
    %v282 = vld [vmem:[#allocation7 + $0x234] sm:$0xf]
    %v283 = vld [vmem:[#allocation7 + $0x238] sm:$0xf]
    %v284 = vld [vmem:[#allocation7 + $0x23c] sm:$0xf]
    %v285 = vld [vmem:[#allocation7 + $0x240] sm:$0xf]
    %v286 = vld [vmem:[#allocation7 + $0x244] sm:$0xf]
    %v287 = vld [vmem:[#allocation7 + $0x248] sm:$0xf]
    %v288 = vld [vmem:[#allocation7 + $0x24c] sm:$0xf]
    %v289 = vld [vmem:[#allocation7 + $0x250] sm:$0xf]
    %v290 = vld [vmem:[#allocation7 + $0x254] sm:$0xf]
    %v291 = vld [vmem:[#allocation7 + $0x258] sm:$0xf]
    %v292 = vld [vmem:[#allocation7 + $0x25c] sm:$0xf]
    %v293 = vld [vmem:[#allocation7 + $0x260] sm:$0xf]
    %v294 = vld [vmem:[#allocation7 + $0x264] sm:$0xf]
    %v295 = vld [vmem:[#allocation7 + $0x268] sm:$0xf]
    %v296 = vld [vmem:[#allocation7 + $0x26c] sm:$0xf]
    %v297 = vld [vmem:[#allocation7 + $0x270] sm:$0xf]
    %v298 = vld [vmem:[#allocation7 + $0x274] sm:$0xf]
    %v299 = vld [vmem:[#allocation7 + $0x278] sm:$0xf]
    %v300 = vld [vmem:[#allocation7 + $0x27c] sm:$0xf]
    %v301 = vld [vmem:[#allocation7 + $0x280] sm:$0xf]
    %v302 = vld [vmem:[#allocation7 + $0x284] sm:$0xf]
    %v303 = vld [vmem:[#allocation7 + $0x288] sm:$0xf]
    %v304 = vld [vmem:[#allocation7 + $0x28c] sm:$0xf]
    %v305 = vld [vmem:[#allocation7 + $0x290] sm:$0xf]
    %v306 = vld [vmem:[#allocation7 + $0x294] sm:$0xf]
    %v307 = vld [vmem:[#allocation7 + $0x298] sm:$0xf]
    %v308 = vld [vmem:[#allocation7 + $0x29c] sm:$0xf]
    %v309 = vld [vmem:[#allocation7 + $0x2a0] sm:$0xf]
    %v310 = vld [vmem:[#allocation7 + $0x2a4] sm:$0xf]
    %v311 = vld [vmem:[#allocation7 + $0x2a8] sm:$0xf]
    %v312 = vld [vmem:[#allocation7 + $0x2ac] sm:$0xf]
    %v313 = vld [vmem:[#allocation7 + $0x2b0] sm:$0xf]
    %v314 = vld [vmem:[#allocation7 + $0x2b4] sm:$0xf]
    %v315 = vld [vmem:[#allocation7 + $0x2b8] sm:$0xf]
    %v316 = vld [vmem:[#allocation7 + $0x2bc] sm:$0xf]
    %v317 = vld [vmem:[#allocation7 + $0x2c0] sm:$0xf]
    %v318 = vld [vmem:[#allocation7 + $0x2c4] sm:$0xf]
    %v319 = vld [vmem:[#allocation7 + $0x2c8] sm:$0xf]
    %v320 = vld [vmem:[#allocation7 + $0x2cc] sm:$0xf]
    %v321 = vld [vmem:[#allocation7 + $0x2d0] sm:$0xf]
    %v322 = vld [vmem:[#allocation7 + $0x2d4] sm:$0xf]
    %v323 = vld [vmem:[#allocation7 + $0x2d8] sm:$0xf]
    %v324 = vld [vmem:[#allocation7 + $0x2dc] sm:$0xf]
    %v325 = vld [vmem:[#allocation7 + $0x2e0] sm:$0xf]
    %v326 = vld [vmem:[#allocation7 + $0x2e4] sm:$0xf]
    %v327 = vld [vmem:[#allocation7 + $0x2e8] sm:$0xf]
    %v328 = vld [vmem:[#allocation7 + $0x2ec] sm:$0xf]
    %v329 = vld [vmem:[#allocation7 + $0x2f0] sm:$0xf]
    %v330 = vld [vmem:[#allocation7 + $0x2f4] sm:$0xf]
    %v331 = vld [vmem:[#allocation7 + $0x2f8] sm:$0xf]
    %v332 = vld [vmem:[#allocation7 + $0x2fc] sm:$0xf]
    %v333 = vld [vmem:[#allocation7 + $0x300] sm:$0xf]
    %v334 = vld [vmem:[#allocation7 + $0x304] sm:$0xf]
    %v335 = vld [vmem:[#allocation7 + $0x308] sm:$0xf]
    %v336 = vld [vmem:[#allocation7 + $0x30c] sm:$0xf]
    %v337 = vld [vmem:[#allocation7 + $0x310] sm:$0xf]
    %v338 = vld [vmem:[#allocation7 + $0x314] sm:$0xf]
    %v339 = vld [vmem:[#allocation7 + $0x318] sm:$0xf]
    %v340 = vld [vmem:[#allocation7 + $0x31c] sm:$0xf]
    %v341 = vld [vmem:[#allocation7 + $0x320] sm:$0xf]
    %v342 = vld [vmem:[#allocation7 + $0x324] sm:$0xf]
    %v343 = vld [vmem:[#allocation7 + $0x328] sm:$0xf]
    %v344 = vld [vmem:[#allocation7 + $0x32c] sm:$0xf]
    %v345 = vld [vmem:[#allocation7 + $0x330] sm:$0xf]
    %v346 = vld [vmem:[#allocation7 + $0x334] sm:$0xf]
    %v347 = vld [vmem:[#allocation7 + $0x338] sm:$0xf]
    %v348 = vld [vmem:[#allocation7 + $0x33c] sm:$0xf]
    %v349 = vld [vmem:[#allocation7 + $0x340] sm:$0xf]
    %v350 = vld [vmem:[#allocation7 + $0x344] sm:$0xf]
    %v351 = vld [vmem:[#allocation7 + $0x348] sm:$0xf]
    %v352 = vld [vmem:[#allocation7 + $0x34c] sm:$0xf]
    %v353 = vld [vmem:[#allocation7 + $0x350] sm:$0xf]
    %v354 = vld [vmem:[#allocation7 + $0x354] sm:$0xf]
    %v355 = vld [vmem:[#allocation7 + $0x358] sm:$0xf]
    %v356 = vld [vmem:[#allocation7 + $0x35c] sm:$0xf]
    %v357 = vld [vmem:[#allocation7 + $0x360] sm:$0xf]
    %v358 = vld [vmem:[#allocation7 + $0x364] sm:$0xf]
    %v359 = vld [vmem:[#allocation7 + $0x368] sm:$0xf]
    %v360 = vld [vmem:[#allocation7 + $0x36c] sm:$0xf]
    %v361 = vld [vmem:[#allocation7 + $0x370] sm:$0xf]
    %v362 = vld [vmem:[#allocation7 + $0x374] sm:$0xf]
    %v363 = vld [vmem:[#allocation7 + $0x378] sm:$0xf]
    %v364 = vld [vmem:[#allocation7 + $0x37c] sm:$0xf]
    %v365 = vld [vmem:[#allocation7 + $0x380] sm:$0xf]
    %v366 = vld [vmem:[#allocation7 + $0x384] sm:$0xf]
    %v367 = vld [vmem:[#allocation7 + $0x388] sm:$0xf]
    %v368 = vld [vmem:[#allocation7 + $0x38c] sm:$0xf]
    %v369 = vld [vmem:[#allocation7 + $0x390] sm:$0xf]
    %v370 = vld [vmem:[#allocation7 + $0x394] sm:$0xf]
    %v371 = vld [vmem:[#allocation7 + $0x398] sm:$0xf]
    %v372 = vld [vmem:[#allocation7 + $0x39c] sm:$0xf]
    %v373 = vld [vmem:[#allocation7 + $0x3a0] sm:$0xf]
    %v374 = vld [vmem:[#allocation7 + $0x3a4] sm:$0xf]
    %v375 = vld [vmem:[#allocation7 + $0x3a8] sm:$0xf]
    %v376 = vld [vmem:[#allocation7 + $0x3ac] sm:$0xf]
    %v377 = vld [vmem:[#allocation7 + $0x3b0] sm:$0xf]
    %v378 = vld [vmem:[#allocation7 + $0x3b4] sm:$0xf]
    %v379 = vld [vmem:[#allocation7 + $0x3b8] sm:$0xf]
    %v380 = vld [vmem:[#allocation7 + $0x3bc] sm:$0xf]
    %v381 = vld [vmem:[#allocation7 + $0x3c0] sm:$0xf]
    %v382 = vld [vmem:[#allocation7 + $0x3c4] sm:$0xf]
    %v383 = vld [vmem:[#allocation7 + $0x3c8] sm:$0xf]
    %v384 = vld [vmem:[#allocation7 + $0x3cc] sm:$0xf]
    %v385 = vld [vmem:[#allocation7 + $0x3d0] sm:$0xf]
    %v386 = vld [vmem:[#allocation7 + $0x3d4] sm:$0xf]
    %v387 = vld [vmem:[#allocation7 + $0x3d8] sm:$0xf]
    %v388 = vld [vmem:[#allocation7 + $0x3dc] sm:$0xf]
    %v389 = vld [vmem:[#allocation7 + $0x3e0] sm:$0xf]
    %v390 = vld [vmem:[#allocation7 + $0x3e4] sm:$0xf]
    %v391 = vld [vmem:[#allocation7 + $0x3e8] sm:$0xf]
    %v392 = vld [vmem:[#allocation7 + $0x3ec] sm:$0xf]
    %v393 = vld [vmem:[#allocation7 + $0x3f0] sm:$0xf]
    %v394 = vld [vmem:[#allocation7 + $0x3f4] sm:$0xf]
    %v395 = vld [vmem:[#allocation7 + $0x3f8] sm:$0xf]
    %v396 = vld [vmem:[#allocation7 + $0x3fc] sm:$0xf]
    %v397 = vld [vmem:[%s3] sm:$0x1]
    %v399 = vperm.slane %v397, 0
    %v657 = vunpack.c.l.b16 %v141
    %v658 = vunpack.c.l.b16 %v142
    %v659 = vunpack.c.l.b16 %v143
    %v660 = vunpack.c.l.b16 %v144
    %v661 = vunpack.c.l.b16 %v145
    %v662 = vunpack.c.l.b16 %v146
    %v663 = vunpack.c.l.b16 %v147
    %v664 = vunpack.c.l.b16 %v148
    %v665 = vunpack.c.l.b16 %v149
    %v666 = vunpack.c.l.b16 %v150
    %v667 = vunpack.c.l.b16 %v151
    %v668 = vunpack.c.l.b16 %v152
    %v669 = vunpack.c.l.b16 %v153
    %v670 = vunpack.c.l.b16 %v154
    %v671 = vunpack.c.l.b16 %v155
    %v672 = vunpack.c.l.b16 %v156
    %v673 = vunpack.c.l.b16 %v157
    %v674 = vunpack.c.l.b16 %v158
    %v675 = vunpack.c.l.b16 %v159
    %v676 = vunpack.c.l.b16 %v160
    %v677 = vunpack.c.l.b16 %v161
    %v678 = vunpack.c.l.b16 %v162
    %v679 = vunpack.c.l.b16 %v163
    %v680 = vunpack.c.l.b16 %v164
    %v681 = vunpack.c.l.b16 %v165
    %v682 = vunpack.c.l.b16 %v166
    %v683 = vunpack.c.l.b16 %v167
    %v684 = vunpack.c.l.b16 %v168
    %v685 = vunpack.c.l.b16 %v169
    %v686 = vunpack.c.l.b16 %v170
    %v687 = vunpack.c.l.b16 %v171
    %v688 = vunpack.c.l.b16 %v172
    %v689 = vunpack.c.l.b16 %v173
    %v690 = vunpack.c.l.b16 %v174
    %v691 = vunpack.c.l.b16 %v175
    %v692 = vunpack.c.l.b16 %v176
    %v693 = vunpack.c.l.b16 %v177
    %v694 = vunpack.c.l.b16 %v178
    %v695 = vunpack.c.l.b16 %v179
    %v696 = vunpack.c.l.b16 %v180
    %v697 = vunpack.c.l.b16 %v181
    %v698 = vunpack.c.l.b16 %v182
    %v699 = vunpack.c.l.b16 %v183
    %v700 = vunpack.c.l.b16 %v184
    %v701 = vunpack.c.l.b16 %v185
    %v702 = vunpack.c.l.b16 %v186
    %v703 = vunpack.c.l.b16 %v187
    %v704 = vunpack.c.l.b16 %v188
    %v705 = vunpack.c.l.b16 %v189
    %v706 = vunpack.c.l.b16 %v190
    %v707 = vunpack.c.l.b16 %v191
    %v708 = vunpack.c.l.b16 %v192
    %v709 = vunpack.c.l.b16 %v193
    %v710 = vunpack.c.l.b16 %v194
    %v711 = vunpack.c.l.b16 %v195
    %v712 = vunpack.c.l.b16 %v196
    %v713 = vunpack.c.l.b16 %v197
    %v714 = vunpack.c.l.b16 %v198
    %v715 = vunpack.c.l.b16 %v199
    %v716 = vunpack.c.l.b16 %v200
    %v717 = vunpack.c.l.b16 %v201
    %v718 = vunpack.c.l.b16 %v202
    %v719 = vunpack.c.l.b16 %v203
    %v720 = vunpack.c.l.b16 %v204
    %v721 = vunpack.c.l.b16 %v205
    %v722 = vunpack.c.l.b16 %v206
    %v723 = vunpack.c.l.b16 %v207
    %v724 = vunpack.c.l.b16 %v208
    %v725 = vunpack.c.l.b16 %v209
    %v726 = vunpack.c.l.b16 %v210
    %v727 = vunpack.c.l.b16 %v211
    %v728 = vunpack.c.l.b16 %v212
    %v729 = vunpack.c.l.b16 %v213
    %v730 = vunpack.c.l.b16 %v214
    %v731 = vunpack.c.l.b16 %v215
    %v732 = vunpack.c.l.b16 %v216
    %v733 = vunpack.c.l.b16 %v217
    %v734 = vunpack.c.l.b16 %v218
    %v735 = vunpack.c.l.b16 %v219
    %v736 = vunpack.c.l.b16 %v220
    %v737 = vunpack.c.l.b16 %v221
    %v738 = vunpack.c.l.b16 %v222
    %v739 = vunpack.c.l.b16 %v223
    %v740 = vunpack.c.l.b16 %v224
    %v741 = vunpack.c.l.b16 %v225
    %v742 = vunpack.c.l.b16 %v226
    %v743 = vunpack.c.l.b16 %v227
    %v744 = vunpack.c.l.b16 %v228
    %v745 = vunpack.c.l.b16 %v229
    %v746 = vunpack.c.l.b16 %v230
    %v747 = vunpack.c.l.b16 %v231
    %v748 = vunpack.c.l.b16 %v232
    %v749 = vunpack.c.l.b16 %v233
    %v750 = vunpack.c.l.b16 %v234
    %v751 = vunpack.c.l.b16 %v235
    %v752 = vunpack.c.l.b16 %v236
    %v753 = vunpack.c.l.b16 %v237
    %v754 = vunpack.c.l.b16 %v238
    %v755 = vunpack.c.l.b16 %v239
    %v756 = vunpack.c.l.b16 %v240
    %v757 = vunpack.c.l.b16 %v241
    %v758 = vunpack.c.l.b16 %v242
    %v759 = vunpack.c.l.b16 %v243
    %v760 = vunpack.c.l.b16 %v244
    %v761 = vunpack.c.l.b16 %v245
    %v762 = vunpack.c.l.b16 %v246
    %v763 = vunpack.c.l.b16 %v247
    %v764 = vunpack.c.l.b16 %v248
    %v765 = vunpack.c.l.b16 %v249
    %v766 = vunpack.c.l.b16 %v250
    %v767 = vunpack.c.l.b16 %v251
    %v768 = vunpack.c.l.b16 %v252
    %v769 = vunpack.c.l.b16 %v253
    %v770 = vunpack.c.l.b16 %v254
    %v771 = vunpack.c.l.b16 %v255
    %v772 = vunpack.c.l.b16 %v256
    %v773 = vunpack.c.l.b16 %v257
    %v774 = vunpack.c.l.b16 %v258
    %v775 = vunpack.c.l.b16 %v259
    %v776 = vunpack.c.l.b16 %v260
    %v777 = vunpack.c.l.b16 %v261
    %v778 = vunpack.c.l.b16 %v262
    %v779 = vunpack.c.l.b16 %v263
    %v780 = vunpack.c.l.b16 %v264
    %v781 = vunpack.c.l.b16 %v265
    %v782 = vunpack.c.l.b16 %v266
    %v783 = vunpack.c.l.b16 %v267
    %v784 = vunpack.c.l.b16 %v268
    %v785 = vunpack.c.l.b16 %v269
    %v786 = vunpack.c.l.b16 %v270
    %v787 = vunpack.c.l.b16 %v271
    %v788 = vunpack.c.l.b16 %v272
    %v789 = vunpack.c.l.b16 %v273
    %v790 = vunpack.c.l.b16 %v274
    %v791 = vunpack.c.l.b16 %v275
    %v792 = vunpack.c.l.b16 %v276
    %v793 = vunpack.c.l.b16 %v277
    %v794 = vunpack.c.l.b16 %v278
    %v795 = vunpack.c.l.b16 %v279
    %v796 = vunpack.c.l.b16 %v280
    %v797 = vunpack.c.l.b16 %v281
    %v798 = vunpack.c.l.b16 %v282
    %v799 = vunpack.c.l.b16 %v283
    %v800 = vunpack.c.l.b16 %v284
    %v801 = vunpack.c.l.b16 %v285
    %v802 = vunpack.c.l.b16 %v286
    %v803 = vunpack.c.l.b16 %v287
    %v804 = vunpack.c.l.b16 %v288
    %v805 = vunpack.c.l.b16 %v289
    %v806 = vunpack.c.l.b16 %v290
    %v807 = vunpack.c.l.b16 %v291
    %v808 = vunpack.c.l.b16 %v292
    %v809 = vunpack.c.l.b16 %v293
    %v810 = vunpack.c.l.b16 %v294
    %v811 = vunpack.c.l.b16 %v295
    %v812 = vunpack.c.l.b16 %v296
    %v813 = vunpack.c.l.b16 %v297
    %v814 = vunpack.c.l.b16 %v298
    %v815 = vunpack.c.l.b16 %v299
    %v816 = vunpack.c.l.b16 %v300
    %v817 = vunpack.c.l.b16 %v301
    %v818 = vunpack.c.l.b16 %v302
    %v819 = vunpack.c.l.b16 %v303
    %v820 = vunpack.c.l.b16 %v304
    %v821 = vunpack.c.l.b16 %v305
    %v822 = vunpack.c.l.b16 %v306
    %v823 = vunpack.c.l.b16 %v307
    %v824 = vunpack.c.l.b16 %v308
    %v825 = vunpack.c.l.b16 %v309
    %v826 = vunpack.c.l.b16 %v310
    %v827 = vunpack.c.l.b16 %v311
    %v828 = vunpack.c.l.b16 %v312
    %v829 = vunpack.c.l.b16 %v313
    %v830 = vunpack.c.l.b16 %v314
    %v831 = vunpack.c.l.b16 %v315
    %v832 = vunpack.c.l.b16 %v316
    %v833 = vunpack.c.l.b16 %v317
    %v834 = vunpack.c.l.b16 %v318
    %v835 = vunpack.c.l.b16 %v319
    %v836 = vunpack.c.l.b16 %v320
    %v837 = vunpack.c.l.b16 %v321
    %v838 = vunpack.c.l.b16 %v322
    %v839 = vunpack.c.l.b16 %v323
    %v840 = vunpack.c.l.b16 %v324
    %v841 = vunpack.c.l.b16 %v325
    %v842 = vunpack.c.l.b16 %v326
    %v843 = vunpack.c.l.b16 %v327
    %v844 = vunpack.c.l.b16 %v328
    %v845 = vunpack.c.l.b16 %v329
    %v846 = vunpack.c.l.b16 %v330
    %v847 = vunpack.c.l.b16 %v331
    %v848 = vunpack.c.l.b16 %v332
    %v849 = vunpack.c.l.b16 %v333
    %v850 = vunpack.c.l.b16 %v334
    %v851 = vunpack.c.l.b16 %v335
    %v852 = vunpack.c.l.b16 %v336
    %v853 = vunpack.c.l.b16 %v337
    %v854 = vunpack.c.l.b16 %v338
    %v855 = vunpack.c.l.b16 %v339
    %v856 = vunpack.c.l.b16 %v340
    %v857 = vunpack.c.l.b16 %v341
    %v858 = vunpack.c.l.b16 %v342
    %v859 = vunpack.c.l.b16 %v343
    %v860 = vunpack.c.l.b16 %v344
    %v861 = vunpack.c.l.b16 %v345
    %v862 = vunpack.c.l.b16 %v346
    %v863 = vunpack.c.l.b16 %v347
    %v864 = vunpack.c.l.b16 %v348
    %v865 = vunpack.c.l.b16 %v349
    %v866 = vunpack.c.l.b16 %v350
    %v867 = vunpack.c.l.b16 %v351
    %v868 = vunpack.c.l.b16 %v352
    %v869 = vunpack.c.l.b16 %v353
    %v870 = vunpack.c.l.b16 %v354
    %v871 = vunpack.c.l.b16 %v355
    %v872 = vunpack.c.l.b16 %v356
    %v873 = vunpack.c.l.b16 %v357
    %v874 = vunpack.c.l.b16 %v358
    %v875 = vunpack.c.l.b16 %v359
    %v876 = vunpack.c.l.b16 %v360
    %v877 = vunpack.c.l.b16 %v361
    %v878 = vunpack.c.l.b16 %v362
    %v879 = vunpack.c.l.b16 %v363
    %v880 = vunpack.c.l.b16 %v364
    %v881 = vunpack.c.l.b16 %v365
    %v882 = vunpack.c.l.b16 %v366
    %v883 = vunpack.c.l.b16 %v367
    %v884 = vunpack.c.l.b16 %v368
    %v885 = vunpack.c.l.b16 %v369
    %v886 = vunpack.c.l.b16 %v370
    %v887 = vunpack.c.l.b16 %v371
    %v888 = vunpack.c.l.b16 %v372
    %v889 = vunpack.c.l.b16 %v373
    %v890 = vunpack.c.l.b16 %v374
    %v891 = vunpack.c.l.b16 %v375
    %v892 = vunpack.c.l.b16 %v376
    %v893 = vunpack.c.l.b16 %v377
    %v894 = vunpack.c.l.b16 %v378
    %v895 = vunpack.c.l.b16 %v379
    %v896 = vunpack.c.l.b16 %v380
    %v897 = vunpack.c.l.b16 %v381
    %v898 = vunpack.c.l.b16 %v382
    %v899 = vunpack.c.l.b16 %v383
    %v900 = vunpack.c.l.b16 %v384
    %v901 = vunpack.c.l.b16 %v385
    %v902 = vunpack.c.l.b16 %v386
    %v903 = vunpack.c.l.b16 %v387
    %v904 = vunpack.c.l.b16 %v388
    %v905 = vunpack.c.l.b16 %v389
    %v906 = vunpack.c.l.b16 %v390
    %v907 = vunpack.c.l.b16 %v391
    %v908 = vunpack.c.l.b16 %v392
    %v909 = vunpack.c.l.b16 %v393
    %v910 = vunpack.c.l.b16 %v394
    %v911 = vunpack.c.l.b16 %v395
    %v912 = vunpack.c.l.b16 %v396
    %v913 = vpack.c.b16 %v658, %v657
    %v914 = vpack.c.b16 %v660, %v659
    %v915 = vpack.c.b16 %v662, %v661
    %v916 = vpack.c.b16 %v664, %v663
    %v917 = vpack.c.b16 %v666, %v665
    %v918 = vpack.c.b16 %v668, %v667
    %v919 = vpack.c.b16 %v670, %v669
    %v920 = vpack.c.b16 %v672, %v671
    %v921 = vpack.c.b16 %v674, %v673
    %v922 = vpack.c.b16 %v676, %v675
    %v923 = vpack.c.b16 %v678, %v677
    %v924 = vpack.c.b16 %v680, %v679
    %v925 = vpack.c.b16 %v682, %v681
    %v926 = vpack.c.b16 %v684, %v683
    %v927 = vpack.c.b16 %v686, %v685
    %v928 = vpack.c.b16 %v688, %v687
    %v929 = vpack.c.b16 %v690, %v689
    %v930 = vpack.c.b16 %v692, %v691
    %v931 = vpack.c.b16 %v694, %v693
    %v932 = vpack.c.b16 %v696, %v695
    %v933 = vpack.c.b16 %v698, %v697
    %v934 = vpack.c.b16 %v700, %v699
    %v935 = vpack.c.b16 %v702, %v701
    %v936 = vpack.c.b16 %v704, %v703
    %v937 = vpack.c.b16 %v706, %v705
    %v938 = vpack.c.b16 %v708, %v707
    %v939 = vpack.c.b16 %v710, %v709
    %v940 = vpack.c.b16 %v712, %v711
    %v941 = vpack.c.b16 %v714, %v713
    %v942 = vpack.c.b16 %v716, %v715
    %v943 = vpack.c.b16 %v718, %v717
    %v944 = vpack.c.b16 %v720, %v719
    %v945 = vpack.c.b16 %v722, %v721
    %v946 = vpack.c.b16 %v724, %v723
    %v947 = vpack.c.b16 %v726, %v725
    %v948 = vpack.c.b16 %v728, %v727
    %v949 = vpack.c.b16 %v730, %v729
    %v950 = vpack.c.b16 %v732, %v731
    %v951 = vpack.c.b16 %v734, %v733
    %v952 = vpack.c.b16 %v736, %v735
    %v953 = vpack.c.b16 %v738, %v737
    %v954 = vpack.c.b16 %v740, %v739
    %v955 = vpack.c.b16 %v742, %v741
    %v956 = vpack.c.b16 %v744, %v743
    %v957 = vpack.c.b16 %v746, %v745
    %v958 = vpack.c.b16 %v748, %v747
    %v959 = vpack.c.b16 %v750, %v749
    %v960 = vpack.c.b16 %v752, %v751
    %v961 = vpack.c.b16 %v754, %v753
    %v962 = vpack.c.b16 %v756, %v755
    %v963 = vpack.c.b16 %v758, %v757
    %v964 = vpack.c.b16 %v760, %v759
    %v965 = vpack.c.b16 %v762, %v761
    %v966 = vpack.c.b16 %v764, %v763
    %v967 = vpack.c.b16 %v766, %v765
    %v968 = vpack.c.b16 %v768, %v767
    %v969 = vpack.c.b16 %v770, %v769
    %v970 = vpack.c.b16 %v772, %v771
    %v971 = vpack.c.b16 %v774, %v773
    %v972 = vpack.c.b16 %v776, %v775
    %v973 = vpack.c.b16 %v778, %v777
    %v974 = vpack.c.b16 %v780, %v779
    %v975 = vpack.c.b16 %v782, %v781
    %v976 = vpack.c.b16 %v784, %v783
    %v977 = vpack.c.b16 %v786, %v785
    %v978 = vpack.c.b16 %v788, %v787
    %v979 = vpack.c.b16 %v790, %v789
    %v980 = vpack.c.b16 %v792, %v791
    %v981 = vpack.c.b16 %v794, %v793
    %v982 = vpack.c.b16 %v796, %v795
    %v983 = vpack.c.b16 %v798, %v797
    %v984 = vpack.c.b16 %v800, %v799
    %v985 = vpack.c.b16 %v802, %v801
    %v986 = vpack.c.b16 %v804, %v803
    %v987 = vpack.c.b16 %v806, %v805
    %v988 = vpack.c.b16 %v808, %v807
    %v989 = vpack.c.b16 %v810, %v809
    %v990 = vpack.c.b16 %v812, %v811
    %v991 = vpack.c.b16 %v814, %v813
    %v992 = vpack.c.b16 %v816, %v815
    %v993 = vpack.c.b16 %v818, %v817
    %v994 = vpack.c.b16 %v820, %v819
    %v995 = vpack.c.b16 %v822, %v821
    %v996 = vpack.c.b16 %v824, %v823
    %v997 = vpack.c.b16 %v826, %v825
    %v998 = vpack.c.b16 %v828, %v827
    %v999 = vpack.c.b16 %v830, %v829
    %v1000 = vpack.c.b16 %v832, %v831
    %v1001 = vpack.c.b16 %v834, %v833
    %v1002 = vpack.c.b16 %v836, %v835
    %v1003 = vpack.c.b16 %v838, %v837
    %v1004 = vpack.c.b16 %v840, %v839
    %v1005 = vpack.c.b16 %v842, %v841
    %v1006 = vpack.c.b16 %v844, %v843
    %v1007 = vpack.c.b16 %v846, %v845
    %v1008 = vpack.c.b16 %v848, %v847
    %v1009 = vpack.c.b16 %v850, %v849
    %v1010 = vpack.c.b16 %v852, %v851
    %v1011 = vpack.c.b16 %v854, %v853
    %v1012 = vpack.c.b16 %v856, %v855
    %v1013 = vpack.c.b16 %v858, %v857
    %v1014 = vpack.c.b16 %v860, %v859
    %v1015 = vpack.c.b16 %v862, %v861
    %v1016 = vpack.c.b16 %v864, %v863
    %v1017 = vpack.c.b16 %v866, %v865
    %v1018 = vpack.c.b16 %v868, %v867
    %v1019 = vpack.c.b16 %v870, %v869
    %v1020 = vpack.c.b16 %v872, %v871
    %v1021 = vpack.c.b16 %v874, %v873
    %v1022 = vpack.c.b16 %v876, %v875
    %v1023 = vpack.c.b16 %v878, %v877
    %v1024 = vpack.c.b16 %v880, %v879
    %v1025 = vpack.c.b16 %v882, %v881
    %v1026 = vpack.c.b16 %v884, %v883
    %v1027 = vpack.c.b16 %v886, %v885
    %v1028 = vpack.c.b16 %v888, %v887
    %v1029 = vpack.c.b16 %v890, %v889
    %v1030 = vpack.c.b16 %v892, %v891
    %v1031 = vpack.c.b16 %v894, %v893
    %v1032 = vpack.c.b16 %v896, %v895
    %v1033 = vpack.c.b16 %v898, %v897
    %v1034 = vpack.c.b16 %v900, %v899
    %v1035 = vpack.c.b16 %v902, %v901
    %v1036 = vpack.c.b16 %v904, %v903
    %v1037 = vpack.c.b16 %v906, %v905
    %v1038 = vpack.c.b16 %v908, %v907
    %v1039 = vpack.c.b16 %v910, %v909
    %v1040 = vpack.c.b16 %v912, %v911
    %1169 = vmatpush.bf16.msra.mxu0 %v920
    %1170 = vmatpush.bf16.msra.mxu0 %v919
    %1171 = vmatpush.bf16.msra.mxu0 %v918
    %1172 = vmatpush.bf16.msra.mxu0 %v917
    %1173 = vmatpush.bf16.msra.mxu0 %v916
    %1174 = vmatpush.bf16.msra.mxu0 %v915
    %1175 = vmatpush.bf16.msra.mxu0 %v914
    %1176 = vmatpush.bf16.msra.mxu0 %v913
    %1177 = vmatmul.bf16.gmra.mxu0 %v125
    %v1178 = vpop.f32.mrf.mxu0
    %v1179 = vadd.f32 %v399, %v1178
    %v1180 = vpop.f32.mrf.mxu0
    %v1181 = vadd.f32 %v399, %v1180
    %1182 = vdwg.mxu0
    %1183 = vmatpush.bf16.msra.mxu0 %v928
    %1184 = vmatpush.bf16.msra.mxu0 %v927
    %1185 = vmatpush.bf16.msra.mxu0 %v926
    %1186 = vmatpush.bf16.msra.mxu0 %v925
    %1187 = vmatpush.bf16.msra.mxu0 %v924
    %1188 = vmatpush.bf16.msra.mxu0 %v923
    %1189 = vmatpush.bf16.msra.mxu0 %v922
    %1190 = vmatpush.bf16.msra.mxu0 %v921
    %1191 = vmatmul.bf16.gmra.mxu0 %v126
    %v1192 = vpop.f32.mrf.mxu0
    %v1193 = vadd.f32 %v1179, %v1192
    %v1194 = vpop.f32.mrf.mxu0
    %v1195 = vadd.f32 %v1181, %v1194
    %1196 = vdwg.mxu0
    %1197 = vmatpush.bf16.msra.mxu0 %v936
    %1198 = vmatpush.bf16.msra.mxu0 %v935
    %1199 = vmatpush.bf16.msra.mxu0 %v934
    %1200 = vmatpush.bf16.msra.mxu0 %v933
    %1201 = vmatpush.bf16.msra.mxu0 %v932
    %1202 = vmatpush.bf16.msra.mxu0 %v931
    %1203 = vmatpush.bf16.msra.mxu0 %v930
    %1204 = vmatpush.bf16.msra.mxu0 %v929
    %1205 = vmatmul.bf16.gmra.mxu0 %v127
    %v1206 = vpop.f32.mrf.mxu0
    %v1207 = vadd.f32 %v1193, %v1206
    %v1208 = vpop.f32.mrf.mxu0
    %v1209 = vadd.f32 %v1195, %v1208
    %1210 = vdwg.mxu0
    %1211 = vmatpush.bf16.msra.mxu0 %v944
    %1212 = vmatpush.bf16.msra.mxu0 %v943
    %1213 = vmatpush.bf16.msra.mxu0 %v942
    %1214 = vmatpush.bf16.msra.mxu0 %v941
    %1215 = vmatpush.bf16.msra.mxu0 %v940
    %1216 = vmatpush.bf16.msra.mxu0 %v939
    %1217 = vmatpush.bf16.msra.mxu0 %v938
    %1218 = vmatpush.bf16.msra.mxu0 %v937
    %1219 = vmatmul.bf16.gmra.mxu0 %v128
    %v1220 = vpop.f32.mrf.mxu0
    %v1221 = vadd.f32 %v1207, %v1220
    %v1222 = vpop.f32.mrf.mxu0
    %v1223 = vadd.f32 %v1209, %v1222
    %1224 = vdwg.mxu0
    %1225 = vmatpush.bf16.msra.mxu0 %v952
    %1226 = vmatpush.bf16.msra.mxu0 %v951
    %1227 = vmatpush.bf16.msra.mxu0 %v950
    %1228 = vmatpush.bf16.msra.mxu0 %v949
    %1229 = vmatpush.bf16.msra.mxu0 %v948
    %1230 = vmatpush.bf16.msra.mxu0 %v947
    %1231 = vmatpush.bf16.msra.mxu0 %v946
    %1232 = vmatpush.bf16.msra.mxu0 %v945
    %1233 = vmatmul.bf16.gmra.mxu0 %v129
    %v1234 = vpop.f32.mrf.mxu0
    %v1235 = vadd.f32 %v1221, %v1234
    %v1236 = vpop.f32.mrf.mxu0
    %v1237 = vadd.f32 %v1223, %v1236
    %1238 = vdwg.mxu0
    %1239 = vmatpush.bf16.msra.mxu0 %v960
    %1240 = vmatpush.bf16.msra.mxu0 %v959
    %1241 = vmatpush.bf16.msra.mxu0 %v958
    %1242 = vmatpush.bf16.msra.mxu0 %v957
    %1243 = vmatpush.bf16.msra.mxu0 %v956
    %1244 = vmatpush.bf16.msra.mxu0 %v955
    %1245 = vmatpush.bf16.msra.mxu0 %v954
    %1246 = vmatpush.bf16.msra.mxu0 %v953
    %1247 = vmatmul.bf16.gmra.mxu0 %v130
    %v1248 = vpop.f32.mrf.mxu0
    %v1249 = vadd.f32 %v1235, %v1248
    %v1250 = vpop.f32.mrf.mxu0
    %v1251 = vadd.f32 %v1237, %v1250
    %1252 = vdwg.mxu0
    %1253 = vmatpush.bf16.msra.mxu0 %v968
    %1254 = vmatpush.bf16.msra.mxu0 %v967
    %1255 = vmatpush.bf16.msra.mxu0 %v966
    %1256 = vmatpush.bf16.msra.mxu0 %v965
    %1257 = vmatpush.bf16.msra.mxu0 %v964
    %1258 = vmatpush.bf16.msra.mxu0 %v963
    %1259 = vmatpush.bf16.msra.mxu0 %v962
    %1260 = vmatpush.bf16.msra.mxu0 %v961
    %1261 = vmatmul.bf16.gmra.mxu0 %v131
    %v1262 = vpop.f32.mrf.mxu0
    %v1263 = vadd.f32 %v1249, %v1262
    %v1264 = vpop.f32.mrf.mxu0
    %v1265 = vadd.f32 %v1251, %v1264
    %1266 = vdwg.mxu0
    %1267 = vmatpush.bf16.msra.mxu0 %v976
    %1268 = vmatpush.bf16.msra.mxu0 %v975
    %1269 = vmatpush.bf16.msra.mxu0 %v974
    %1270 = vmatpush.bf16.msra.mxu0 %v973
    %1271 = vmatpush.bf16.msra.mxu0 %v972
    %1272 = vmatpush.bf16.msra.mxu0 %v971
    %1273 = vmatpush.bf16.msra.mxu0 %v970
    %1274 = vmatpush.bf16.msra.mxu0 %v969
    %1275 = vmatmul.bf16.gmra.mxu0 %v132
    %v1276 = vpop.f32.mrf.mxu0
    %v1277 = vadd.f32 %v1263, %v1276
    %v1278 = vpop.f32.mrf.mxu0
    %v1279 = vadd.f32 %v1265, %v1278
    %1280 = vdwg.mxu0
    %1281 = vmatpush.bf16.msra.mxu0 %v984
    %1282 = vmatpush.bf16.msra.mxu0 %v983
    %1283 = vmatpush.bf16.msra.mxu0 %v982
    %1284 = vmatpush.bf16.msra.mxu0 %v981
    %1285 = vmatpush.bf16.msra.mxu0 %v980
    %1286 = vmatpush.bf16.msra.mxu0 %v979
    %1287 = vmatpush.bf16.msra.mxu0 %v978
    %1288 = vmatpush.bf16.msra.mxu0 %v977
    %1289 = vmatmul.bf16.gmra.mxu0 %v133
    %v1290 = vpop.f32.mrf.mxu0
    %v1291 = vadd.f32 %v1277, %v1290
    %v1292 = vpop.f32.mrf.mxu0
    %v1293 = vadd.f32 %v1279, %v1292
    %1294 = vdwg.mxu0
    %1295 = vmatpush.bf16.msra.mxu0 %v992
    %1296 = vmatpush.bf16.msra.mxu0 %v991
    %1297 = vmatpush.bf16.msra.mxu0 %v990
    %1298 = vmatpush.bf16.msra.mxu0 %v989
    %1299 = vmatpush.bf16.msra.mxu0 %v988
    %1300 = vmatpush.bf16.msra.mxu0 %v987
    %1301 = vmatpush.bf16.msra.mxu0 %v986
    %1302 = vmatpush.bf16.msra.mxu0 %v985
    %1303 = vmatmul.bf16.gmra.mxu0 %v134
    %v1304 = vpop.f32.mrf.mxu0
    %v1305 = vadd.f32 %v1291, %v1304
    %v1306 = vpop.f32.mrf.mxu0
    %v1307 = vadd.f32 %v1293, %v1306
    %1308 = vdwg.mxu0
    %1309 = vmatpush.bf16.msra.mxu0 %v1000
    %1310 = vmatpush.bf16.msra.mxu0 %v999
    %1311 = vmatpush.bf16.msra.mxu0 %v998
    %1312 = vmatpush.bf16.msra.mxu0 %v997
    %1313 = vmatpush.bf16.msra.mxu0 %v996
    %1314 = vmatpush.bf16.msra.mxu0 %v995
    %1315 = vmatpush.bf16.msra.mxu0 %v994
    %1316 = vmatpush.bf16.msra.mxu0 %v993
    %1317 = vmatmul.bf16.gmra.mxu0 %v135
    %v1318 = vpop.f32.mrf.mxu0
    %v1319 = vadd.f32 %v1305, %v1318
    %v1320 = vpop.f32.mrf.mxu0
    %v1321 = vadd.f32 %v1307, %v1320
    %1322 = vdwg.mxu0
    %1323 = vmatpush.bf16.msra.mxu0 %v1008
    %1324 = vmatpush.bf16.msra.mxu0 %v1007
    %1325 = vmatpush.bf16.msra.mxu0 %v1006
    %1326 = vmatpush.bf16.msra.mxu0 %v1005
    %1327 = vmatpush.bf16.msra.mxu0 %v1004
    %1328 = vmatpush.bf16.msra.mxu0 %v1003
    %1329 = vmatpush.bf16.msra.mxu0 %v1002
    %1330 = vmatpush.bf16.msra.mxu0 %v1001
    %1331 = vmatmul.bf16.gmra.mxu0 %v136
    %v1332 = vpop.f32.mrf.mxu0
    %v1333 = vadd.f32 %v1319, %v1332
    %v1334 = vpop.f32.mrf.mxu0
    %v1335 = vadd.f32 %v1321, %v1334
    %1336 = vdwg.mxu0
    %1337 = vmatpush.bf16.msra.mxu0 %v1016
    %1338 = vmatpush.bf16.msra.mxu0 %v1015
    %1339 = vmatpush.bf16.msra.mxu0 %v1014
    %1340 = vmatpush.bf16.msra.mxu0 %v1013
    %1341 = vmatpush.bf16.msra.mxu0 %v1012
    %1342 = vmatpush.bf16.msra.mxu0 %v1011
    %1343 = vmatpush.bf16.msra.mxu0 %v1010
    %1344 = vmatpush.bf16.msra.mxu0 %v1009
    %1345 = vmatmul.bf16.gmra.mxu0 %v137
    %v1346 = vpop.f32.mrf.mxu0
    %v1347 = vadd.f32 %v1333, %v1346
    %v1348 = vpop.f32.mrf.mxu0
    %v1349 = vadd.f32 %v1335, %v1348
    %1350 = vdwg.mxu0
    %1351 = vmatpush.bf16.msra.mxu0 %v1024
    %1352 = vmatpush.bf16.msra.mxu0 %v1023
    %1353 = vmatpush.bf16.msra.mxu0 %v1022
    %1354 = vmatpush.bf16.msra.mxu0 %v1021
    %1355 = vmatpush.bf16.msra.mxu0 %v1020
    %1356 = vmatpush.bf16.msra.mxu0 %v1019
    %1357 = vmatpush.bf16.msra.mxu0 %v1018
    %1358 = vmatpush.bf16.msra.mxu0 %v1017
    %1359 = vmatmul.bf16.gmra.mxu0 %v138
    %v1360 = vpop.f32.mrf.mxu0
    %v1361 = vadd.f32 %v1347, %v1360
    %v1362 = vpop.f32.mrf.mxu0
    %v1363 = vadd.f32 %v1349, %v1362
    %1364 = vdwg.mxu0
    %1365 = vmatpush.bf16.msra.mxu0 %v1032
    %1366 = vmatpush.bf16.msra.mxu0 %v1031
    %1367 = vmatpush.bf16.msra.mxu0 %v1030
    %1368 = vmatpush.bf16.msra.mxu0 %v1029
    %1369 = vmatpush.bf16.msra.mxu0 %v1028
    %1370 = vmatpush.bf16.msra.mxu0 %v1027
    %1371 = vmatpush.bf16.msra.mxu0 %v1026
    %1372 = vmatpush.bf16.msra.mxu0 %v1025
    %1373 = vmatmul.bf16.gmra.mxu0 %v139
    %v1374 = vpop.f32.mrf.mxu0
    %v1375 = vadd.f32 %v1361, %v1374
    %v1376 = vpop.f32.mrf.mxu0
    %v1377 = vadd.f32 %v1363, %v1376
    %1378 = vdwg.mxu0
    %1379 = vmatpush.bf16.msra.mxu0 %v1040
    %1380 = vmatpush.bf16.msra.mxu0 %v1039
    %1381 = vmatpush.bf16.msra.mxu0 %v1038
    %1382 = vmatpush.bf16.msra.mxu0 %v1037
    %1383 = vmatpush.bf16.msra.mxu0 %v1036
    %1384 = vmatpush.bf16.msra.mxu0 %v1035
    %1385 = vmatpush.bf16.msra.mxu0 %v1034
    %1386 = vmatpush.bf16.msra.mxu0 %v1033
    %1387 = vmatmul.bf16.gmra.mxu0 %v140
    %v1388 = vpop.f32.mrf.mxu0
    %v1389 = vadd.f32 %v1375, %v1388
    %v1390 = vpop.f32.mrf.mxu0
    %v1391 = vadd.f32 %v1377, %v1390
    %1392 = vdwg.mxu0
    %v1393 = vmax.f32 %v1389, 0.0
    %v1394 = vmax.f32 %v1391, 0.0
    %v1395 = vld [vmem:[#allocation5] sm:$0xff]
    %v1396 = vld [vmem:[#allocation5 + $0x8] sm:$0xff]
    %v1397 = vld [vmem:[#allocation5 + $0x10] sm:$0xff]
    %v1398 = vld [vmem:[#allocation5 + $0x18] sm:$0xff]
    %v1399 = vld [vmem:[#allocation5 + $0x20] sm:$0xff]
    %v1400 = vld [vmem:[#allocation5 + $0x28] sm:$0xff]
    %v1401 = vld [vmem:[#allocation5 + $0x30] sm:$0xff]
    %v1402 = vld [vmem:[#allocation5 + $0x38] sm:$0xff]
    %v1403 = vld [vmem:[#allocation5 + $0x40] sm:$0xff]
    %v1404 = vld [vmem:[#allocation5 + $0x48] sm:$0xff]
    %v1405 = vld [vmem:[#allocation5 + $0x50] sm:$0xff]
    %v1406 = vld [vmem:[#allocation5 + $0x58] sm:$0xff]
    %v1407 = vld [vmem:[#allocation5 + $0x60] sm:$0xff]
    %v1408 = vld [vmem:[#allocation5 + $0x68] sm:$0xff]
    %v1409 = vld [vmem:[#allocation5 + $0x70] sm:$0xff]
    %v1410 = vld [vmem:[#allocation5 + $0x78] sm:$0xff]
    %v1411 = vld [vmem:[#allocation5 + $0x80] sm:$0xff]
    %v1412 = vld [vmem:[#allocation5 + $0x88] sm:$0xff]
    %v1413 = vld [vmem:[#allocation5 + $0x90] sm:$0xff]
    %v1414 = vld [vmem:[#allocation5 + $0x98] sm:$0xff]
    %v1415 = vld [vmem:[#allocation5 + $0xa0] sm:$0xff]
    %v1416 = vld [vmem:[#allocation5 + $0xa8] sm:$0xff]
    %v1417 = vld [vmem:[#allocation5 + $0xb0] sm:$0xff]
    %v1418 = vld [vmem:[#allocation5 + $0xb8] sm:$0xff]
    %v1419 = vpack.c.bf16 %v1396, %v1395
    %v1420 = vpack.c.bf16 %v1398, %v1397
    %v1421 = vpack.c.bf16 %v1400, %v1399
    %v1422 = vpack.c.bf16 %v1402, %v1401
    %v1423 = vpack.c.bf16 %v1404, %v1403
    %v1424 = vpack.c.bf16 %v1406, %v1405
    %v1425 = vpack.c.bf16 %v1408, %v1407
    %v1426 = vpack.c.bf16 %v1410, %v1409
    %v1427 = vpack.c.bf16 %v1412, %v1411
    %v1428 = vpack.c.bf16 %v1414, %v1413
    %v1429 = vpack.c.bf16 %v1416, %v1415
    %v1430 = vpack.c.bf16 %v1418, %v1417
    %v1431 = vld [vmem:[#allocation8] sm:$0xf]
    %v1432 = vld [vmem:[#allocation8 + $0x4] sm:$0xf]
    %v1433 = vld [vmem:[#allocation8 + $0x8] sm:$0xf]
    %v1434 = vld [vmem:[#allocation8 + $0xc] sm:$0xf]
    %v1435 = vld [vmem:[#allocation8 + $0x10] sm:$0xf]
    %v1436 = vld [vmem:[#allocation8 + $0x14] sm:$0xf]
    %v1437 = vld [vmem:[#allocation8 + $0x18] sm:$0xf]
    %v1438 = vld [vmem:[#allocation8 + $0x1c] sm:$0xf]
    %v1439 = vld [vmem:[#allocation8 + $0x20] sm:$0xf]
    %v1440 = vld [vmem:[#allocation8 + $0x24] sm:$0xf]
    %v1441 = vld [vmem:[#allocation8 + $0x28] sm:$0xf]
    %v1442 = vld [vmem:[#allocation8 + $0x2c] sm:$0xf]
    %v1443 = vld [vmem:[#allocation8 + $0x30] sm:$0xf]
    %v1444 = vld [vmem:[#allocation8 + $0x34] sm:$0xf]
    %v1445 = vld [vmem:[#allocation8 + $0x38] sm:$0xf]
    %v1446 = vld [vmem:[#allocation8 + $0x3c] sm:$0xf]
    %v1447 = vld [vmem:[#allocation8 + $0x40] sm:$0xf]
    %v1448 = vld [vmem:[#allocation8 + $0x44] sm:$0xf]
    %v1449 = vld [vmem:[#allocation8 + $0x48] sm:$0xf]
    %v1450 = vld [vmem:[#allocation8 + $0x4c] sm:$0xf]
    %v1451 = vld [vmem:[#allocation8 + $0x50] sm:$0xf]
    %v1452 = vld [vmem:[#allocation8 + $0x54] sm:$0xf]
    %v1453 = vld [vmem:[#allocation8 + $0x58] sm:$0xf]
    %v1454 = vld [vmem:[#allocation8 + $0x5c] sm:$0xf]
    %v1455 = vld [vmem:[#allocation8 + $0x60] sm:$0xf]
    %v1456 = vld [vmem:[#allocation8 + $0x64] sm:$0xf]
    %v1457 = vld [vmem:[#allocation8 + $0x68] sm:$0xf]
    %v1458 = vld [vmem:[#allocation8 + $0x6c] sm:$0xf]
    %v1459 = vld [vmem:[#allocation8 + $0x70] sm:$0xf]
    %v1460 = vld [vmem:[#allocation8 + $0x74] sm:$0xf]
    %v1461 = vld [vmem:[#allocation8 + $0x78] sm:$0xf]
    %v1462 = vld [vmem:[#allocation8 + $0x7c] sm:$0xf]
    %v1463 = vld [vmem:[#allocation8 + $0x80] sm:$0xf]
    %v1464 = vld [vmem:[#allocation8 + $0x84] sm:$0xf]
    %v1465 = vld [vmem:[#allocation8 + $0x88] sm:$0xf]
    %v1466 = vld [vmem:[#allocation8 + $0x8c] sm:$0xf]
    %v1467 = vld [vmem:[#allocation8 + $0x90] sm:$0xf]
    %v1468 = vld [vmem:[#allocation8 + $0x94] sm:$0xf]
    %v1469 = vld [vmem:[#allocation8 + $0x98] sm:$0xf]
    %v1470 = vld [vmem:[#allocation8 + $0x9c] sm:$0xf]
    %v1471 = vld [vmem:[#allocation8 + $0xa0] sm:$0xf]
    %v1472 = vld [vmem:[#allocation8 + $0xa4] sm:$0xf]
    %v1473 = vld [vmem:[#allocation8 + $0xa8] sm:$0xf]
    %v1474 = vld [vmem:[#allocation8 + $0xac] sm:$0xf]
    %v1475 = vld [vmem:[#allocation8 + $0xb0] sm:$0xf]
    %v1476 = vld [vmem:[#allocation8 + $0xb4] sm:$0xf]
    %v1477 = vld [vmem:[#allocation8 + $0xb8] sm:$0xf]
    %v1478 = vld [vmem:[#allocation8 + $0xbc] sm:$0xf]
    %v1479 = vld [vmem:[#allocation8 + $0xc0] sm:$0xf]
    %v1480 = vld [vmem:[#allocation8 + $0xc4] sm:$0xf]
    %v1481 = vld [vmem:[#allocation8 + $0xc8] sm:$0xf]
    %v1482 = vld [vmem:[#allocation8 + $0xcc] sm:$0xf]
    %v1483 = vld [vmem:[#allocation8 + $0xd0] sm:$0xf]
    %v1484 = vld [vmem:[#allocation8 + $0xd4] sm:$0xf]
    %v1485 = vld [vmem:[#allocation8 + $0xd8] sm:$0xf]
    %v1486 = vld [vmem:[#allocation8 + $0xdc] sm:$0xf]
    %v1487 = vld [vmem:[#allocation8 + $0xe0] sm:$0xf]
    %v1488 = vld [vmem:[#allocation8 + $0xe4] sm:$0xf]
    %v1489 = vld [vmem:[#allocation8 + $0xe8] sm:$0xf]
    %v1490 = vld [vmem:[#allocation8 + $0xec] sm:$0xf]
    %v1491 = vld [vmem:[#allocation8 + $0xf0] sm:$0xf]
    %v1492 = vld [vmem:[#allocation8 + $0xf4] sm:$0xf]
    %v1493 = vld [vmem:[#allocation8 + $0xf8] sm:$0xf]
    %v1494 = vld [vmem:[#allocation8 + $0xfc] sm:$0xf]
    %v1495 = vld [vmem:[%s5] sm:$0x1]
    %v1497 = vperm.slane %v1495, 0
    %v1511 = vunpack.c.l.b16 %v1419
    %v1512 = vunpack.c.h.b16 %v1419
    %v1513 = vunpack.c.l.b16 %v1420
    %v1514 = vunpack.c.h.b16 %v1420
    %v1515 = vunpack.c.l.b16 %v1421
    %v1516 = vunpack.c.h.b16 %v1421
    %v1517 = vunpack.c.l.b16 %v1422
    %v1518 = vunpack.c.h.b16 %v1422
    %v1519 = vunpack.c.l.b16 %v1423
    %v1520 = vunpack.c.h.b16 %v1423
    %v1521 = vunpack.c.l.b16 %v1424
    %v1522 = vunpack.c.h.b16 %v1424
    %v1523 = vunpack.c.l.b16 %v1425
    %v1524 = vunpack.c.h.b16 %v1425
    %v1525 = vunpack.c.l.b16 %v1426
    %v1526 = vunpack.c.h.b16 %v1426
    %v1527 = vunpack.c.l.b16 %v1427
    %v1528 = vunpack.c.h.b16 %v1427
    %v1529 = vunpack.c.l.b16 %v1428
    %v1530 = vunpack.c.h.b16 %v1428
    %v1531 = vunpack.c.l.b16 %v1429
    %v1532 = vunpack.c.h.b16 %v1429
    %v1533 = vunpack.c.l.b16 %v1430
    %v1534 = vunpack.c.h.b16 %v1430
    %v1535 = vpack.c.b16 %v1515, %v1511
    %v1536 = vpack.c.b16 %v1516, %v1512
    %v1537 = vpack.c.b16 %v1517, %v1513
    %v1538 = vpack.c.b16 %v1518, %v1514
    %v1539 = vpack.c.b16 %v1523, %v1519
    %v1540 = vpack.c.b16 %v1524, %v1520
    %v1541 = vpack.c.b16 %v1525, %v1521
    %v1542 = vpack.c.b16 %v1526, %v1522
    %v1543 = vpack.c.b16 %v1531, %v1527
    %v1544 = vpack.c.b16 %v1532, %v1528
    %v1545 = vpack.c.b16 %v1533, %v1529
    %v1546 = vpack.c.b16 %v1534, %v1530
    %v1623 = vunpack.c.l.b16 %v1431
    %v1624 = vunpack.c.l.b16 %v1432
    %v1625 = vunpack.c.l.b16 %v1433
    %v1626 = vunpack.c.l.b16 %v1434
    %v1627 = vunpack.c.l.b16 %v1435
    %v1628 = vunpack.c.l.b16 %v1436
    %v1629 = vunpack.c.l.b16 %v1437
    %v1630 = vunpack.c.l.b16 %v1438
    %v1631 = vunpack.c.l.b16 %v1439
    %v1632 = vunpack.c.l.b16 %v1440
    %v1633 = vunpack.c.l.b16 %v1441
    %v1634 = vunpack.c.l.b16 %v1442
    %v1635 = vunpack.c.l.b16 %v1443
    %v1636 = vunpack.c.l.b16 %v1444
    %v1637 = vunpack.c.l.b16 %v1445
    %v1638 = vunpack.c.l.b16 %v1446
    %v1639 = vunpack.c.l.b16 %v1447
    %v1640 = vunpack.c.l.b16 %v1448
    %v1641 = vunpack.c.l.b16 %v1449
    %v1642 = vunpack.c.l.b16 %v1450
    %v1643 = vunpack.c.l.b16 %v1451
    %v1644 = vunpack.c.l.b16 %v1452
    %v1645 = vunpack.c.l.b16 %v1453
    %v1646 = vunpack.c.l.b16 %v1454
    %v1647 = vunpack.c.l.b16 %v1455
    %v1648 = vunpack.c.l.b16 %v1456
    %v1649 = vunpack.c.l.b16 %v1457
    %v1650 = vunpack.c.l.b16 %v1458
    %v1651 = vunpack.c.l.b16 %v1459
    %v1652 = vunpack.c.l.b16 %v1460
    %v1653 = vunpack.c.l.b16 %v1461
    %v1654 = vunpack.c.l.b16 %v1462
    %v1655 = vunpack.c.l.b16 %v1463
    %v1656 = vunpack.c.l.b16 %v1464
    %v1657 = vunpack.c.l.b16 %v1465
    %v1658 = vunpack.c.l.b16 %v1466
    %v1659 = vunpack.c.l.b16 %v1467
    %v1660 = vunpack.c.l.b16 %v1468
    %v1661 = vunpack.c.l.b16 %v1469
    %v1662 = vunpack.c.l.b16 %v1470
    %v1663 = vunpack.c.l.b16 %v1471
    %v1664 = vunpack.c.l.b16 %v1472
    %v1665 = vunpack.c.l.b16 %v1473
    %v1666 = vunpack.c.l.b16 %v1474
    %v1667 = vunpack.c.l.b16 %v1475
    %v1668 = vunpack.c.l.b16 %v1476
    %v1669 = vunpack.c.l.b16 %v1477
    %v1670 = vunpack.c.l.b16 %v1478
    %v1671 = vunpack.c.l.b16 %v1479
    %v1672 = vunpack.c.l.b16 %v1480
    %v1673 = vunpack.c.l.b16 %v1481
    %v1674 = vunpack.c.l.b16 %v1482
    %v1675 = vunpack.c.l.b16 %v1483
    %v1676 = vunpack.c.l.b16 %v1484
    %v1677 = vunpack.c.l.b16 %v1485
    %v1678 = vunpack.c.l.b16 %v1486
    %v1679 = vunpack.c.l.b16 %v1487
    %v1680 = vunpack.c.l.b16 %v1488
    %v1681 = vunpack.c.l.b16 %v1489
    %v1682 = vunpack.c.l.b16 %v1490
    %v1683 = vunpack.c.l.b16 %v1491
    %v1684 = vunpack.c.l.b16 %v1492
    %v1685 = vunpack.c.l.b16 %v1493
    %v1686 = vunpack.c.l.b16 %v1494
    %v1687 = vpack.c.b16 %v1624, %v1623
    %v1688 = vpack.c.b16 %v1626, %v1625
    %v1689 = vpack.c.b16 %v1628, %v1627
    %v1690 = vpack.c.b16 %v1630, %v1629
    %v1691 = vpack.c.b16 %v1632, %v1631
    %v1692 = vpack.c.b16 %v1634, %v1633
    %v1693 = vpack.c.b16 %v1636, %v1635
    %v1694 = vpack.c.b16 %v1638, %v1637
    %v1695 = vpack.c.b16 %v1640, %v1639
    %v1696 = vpack.c.b16 %v1642, %v1641
    %v1697 = vpack.c.b16 %v1644, %v1643
    %v1698 = vpack.c.b16 %v1646, %v1645
    %v1699 = vpack.c.b16 %v1648, %v1647
    %v1700 = vpack.c.b16 %v1650, %v1649
    %v1701 = vpack.c.b16 %v1652, %v1651
    %v1702 = vpack.c.b16 %v1654, %v1653
    %v1703 = vpack.c.b16 %v1656, %v1655
    %v1704 = vpack.c.b16 %v1658, %v1657
    %v1705 = vpack.c.b16 %v1660, %v1659
    %v1706 = vpack.c.b16 %v1662, %v1661
    %v1707 = vpack.c.b16 %v1664, %v1663
    %v1708 = vpack.c.b16 %v1666, %v1665
    %v1709 = vpack.c.b16 %v1668, %v1667
    %v1710 = vpack.c.b16 %v1670, %v1669
    %v1711 = vpack.c.b16 %v1672, %v1671
    %v1712 = vpack.c.b16 %v1674, %v1673
    %v1713 = vpack.c.b16 %v1676, %v1675
    %v1714 = vpack.c.b16 %v1678, %v1677
    %v1715 = vpack.c.b16 %v1680, %v1679
    %v1716 = vpack.c.b16 %v1682, %v1681
    %v1717 = vpack.c.b16 %v1684, %v1683
    %v1718 = vpack.c.b16 %v1686, %v1685
    %1751 = vmatpush.bf16.msra.mxu0 %v1694
    %1752 = vmatpush.bf16.msra.mxu0 %v1693
    %1753 = vmatpush.bf16.msra.mxu0 %v1692
    %1754 = vmatpush.bf16.msra.mxu0 %v1691
    %1755 = vmatpush.bf16.msra.mxu0 %v1690
    %1756 = vmatpush.bf16.msra.mxu0 %v1689
    %1757 = vmatpush.bf16.msra.mxu0 %v1688
    %1758 = vmatpush.bf16.msra.mxu0 %v1687
    %1759 = vmatmul.bf16.gmra.mxu0 %v1535
    %v1760 = vpop.f32.mrf.mxu0
    %v1761 = vadd.f32 %v1497, %v1760
    %v1762 = vpop.f32.mrf.mxu0
    %v1763 = vadd.f32 %v1497, %v1762
    %1764 = vmatmul.bf16.gmra.mxu0 %v1539
    %v1765 = vpop.f32.mrf.mxu0
    %v1766 = vadd.f32 %v1497, %v1765
    %v1767 = vpop.f32.mrf.mxu0
    %v1768 = vadd.f32 %v1497, %v1767
    %1769 = vmatmul.bf16.gmra.mxu0 %v1543
    %v1770 = vpop.f32.mrf.mxu0
    %v1771 = vadd.f32 %v1497, %v1770
    %v1772 = vpop.f32.mrf.mxu0
    %v1773 = vadd.f32 %v1497, %v1772
    %1774 = vdwg.mxu0
    %1775 = vmatpush.bf16.msra.mxu0 %v1702
    %1776 = vmatpush.bf16.msra.mxu0 %v1701
    %1777 = vmatpush.bf16.msra.mxu0 %v1700
    %1778 = vmatpush.bf16.msra.mxu0 %v1699
    %1779 = vmatpush.bf16.msra.mxu0 %v1698
    %1780 = vmatpush.bf16.msra.mxu0 %v1697
    %1781 = vmatpush.bf16.msra.mxu0 %v1696
    %1782 = vmatpush.bf16.msra.mxu0 %v1695
    %1783 = vmatmul.bf16.gmra.mxu0 %v1536
    %v1784 = vpop.f32.mrf.mxu0
    %v1785 = vadd.f32 %v1761, %v1784
    %v1786 = vpop.f32.mrf.mxu0
    %v1787 = vadd.f32 %v1763, %v1786
    %1788 = vmatmul.bf16.gmra.mxu0 %v1540
    %v1789 = vpop.f32.mrf.mxu0
    %v1790 = vadd.f32 %v1766, %v1789
    %v1791 = vpop.f32.mrf.mxu0
    %v1792 = vadd.f32 %v1768, %v1791
    %1793 = vmatmul.bf16.gmra.mxu0 %v1544
    %v1794 = vpop.f32.mrf.mxu0
    %v1795 = vadd.f32 %v1771, %v1794
    %v1796 = vpop.f32.mrf.mxu0
    %v1797 = vadd.f32 %v1773, %v1796
    %1798 = vdwg.mxu0
    %1799 = vmatpush.bf16.msra.mxu0 %v1710
    %1800 = vmatpush.bf16.msra.mxu0 %v1709
    %1801 = vmatpush.bf16.msra.mxu0 %v1708
    %1802 = vmatpush.bf16.msra.mxu0 %v1707
    %1803 = vmatpush.bf16.msra.mxu0 %v1706
    %1804 = vmatpush.bf16.msra.mxu0 %v1705
    %1805 = vmatpush.bf16.msra.mxu0 %v1704
    %1806 = vmatpush.bf16.msra.mxu0 %v1703
    %1807 = vmatmul.bf16.gmra.mxu0 %v1537
    %v1808 = vpop.f32.mrf.mxu0
    %v1809 = vadd.f32 %v1785, %v1808
    %v1810 = vpop.f32.mrf.mxu0
    %v1811 = vadd.f32 %v1787, %v1810
    %1812 = vmatmul.bf16.gmra.mxu0 %v1541
    %v1813 = vpop.f32.mrf.mxu0
    %v1814 = vadd.f32 %v1790, %v1813
    %v1815 = vpop.f32.mrf.mxu0
    %v1816 = vadd.f32 %v1792, %v1815
    %1817 = vmatmul.bf16.gmra.mxu0 %v1545
    %v1818 = vpop.f32.mrf.mxu0
    %v1819 = vadd.f32 %v1795, %v1818
    %v1820 = vpop.f32.mrf.mxu0
    %v1821 = vadd.f32 %v1797, %v1820
    %1822 = vdwg.mxu0
    %1823 = vmatpush.bf16.msra.mxu0 %v1718
    %1824 = vmatpush.bf16.msra.mxu0 %v1717
    %1825 = vmatpush.bf16.msra.mxu0 %v1716
    %1826 = vmatpush.bf16.msra.mxu0 %v1715
    %1827 = vmatpush.bf16.msra.mxu0 %v1714
    %1828 = vmatpush.bf16.msra.mxu0 %v1713
    %1829 = vmatpush.bf16.msra.mxu0 %v1712
    %1830 = vmatpush.bf16.msra.mxu0 %v1711
    %1831 = vmatmul.bf16.gmra.mxu0 %v1538
    %v1832 = vpop.f32.mrf.mxu0
    %v1833 = vadd.f32 %v1809, %v1832
    %v1834 = vpop.f32.mrf.mxu0
    %v1835 = vadd.f32 %v1811, %v1834
    %1836 = vmatmul.bf16.gmra.mxu0 %v1542
    %v1837 = vpop.f32.mrf.mxu0
    %v1838 = vadd.f32 %v1814, %v1837
    %v1839 = vpop.f32.mrf.mxu0
    %v1840 = vadd.f32 %v1816, %v1839
    %1841 = vmatmul.bf16.gmra.mxu0 %v1546
    %v1842 = vpop.f32.mrf.mxu0
    %v1843 = vadd.f32 %v1819, %v1842
    %v1844 = vpop.f32.mrf.mxu0
    %v1845 = vadd.f32 %v1821, %v1844
    %1846 = vdwg.mxu0
    %v1847 = vmax.f32 %v1833, 0.0
    %v1848 = vmax.f32 %v1835, 0.0
    %v1849 = vmax.f32 %v1838, 0.0
    %v1850 = vmax.f32 %v1840, 0.0
    %v1851 = vmax.f32 %v1843, 0.0
    %v1852 = vmax.f32 %v1845, 0.0
    %v1853 = vld [vmem:[%s6] sm:$0xf]
    %v1854 = vperm.slane %v1853, 0
    %v1855 = vmul.f32 %v1393, %v1854
    %v1856 = vmul.f32 %v1394, %v1854
    %v1857 = vperm.slane %v1853, 1
    %v1858 = vmul.f32 %v1847, %v1857
    %v1859 = vmul.f32 %v1848, %v1857
    %v1860 = vadd.f32 %v1855, %v1858
    %v1861 = vadd.f32 %v1856, %v1859
    %v1862 = vperm.slane %v1853, 2
    %v1863 = vmul.f32 %v1849, %v1862
    %v1864 = vmul.f32 %v1850, %v1862
    %v1865 = vadd.f32 %v1860, %v1863
    %v1866 = vadd.f32 %v1861, %v1864
    %v1867 = vperm.slane %v1853, 3
    %v1868 = vmul.f32 %v1851, %v1867
    %v1869 = vmul.f32 %v1852, %v1867
    %v1870 = vadd.f32 %v1865, %v1868
    %v1871 = vadd.f32 %v1866, %v1869
    %1872 = vadd.xlane.f32.xlu0 %v1870
    %v1873 = vpop.xlane.xlu0 %1872
    %1874 = vadd.xlane.f32.xlu0 %v1871
    %v1875 = vpop.xlane.xlu0 %1874
    %s1876 = sld [smem:[#allocation2]]
    %v1877 = vstv %s1876
    %v1878 = vadd.f32 %v1873, %v1877
    %v1879 = vadd.f32 %v1875, %v1877
    %v1880 = vxor.u32 %v1878, 2147483648
    %v1881 = vxor.u32 %v1879, 2147483648
    %v1882 = vmul.f32 %v1880, 1.442695
    %v1883 = vpow.pop %v1882
    %v1884 = vmul.f32 %v1881, 1.442695
    %v1885 = vpow.pop %v1884
    %v1886 = vadd.f32 %v1883, 1.0
    %v1887 = vadd.f32 %v1885, 1.0
    %v1888 = vrcp.pop %v1886
    %v1889 = vmul.f32 %v1886, %v1888
    %v1890 = vsub.f32 1.0, %v1889
    %v1891 = vmul.f32 %v1888, %v1890
    %v1892 = vadd.f32 %v1888, %v1891
    %vm1893 = vweird.f32 %v1886
    %vm1894 = vweird.f32 %v1888
    %vm1895 = vmor %vm1893, %vm1894
    %v1896 = vsel %vm1895, %v1888, %v1892
    %v1897 = vand.u32 2147483647, %v1886
    %vm1898 = vcmp.eq.f32.partialorder %v1897, 8.507059e+37
    %v1899 = vand.u32 %v1886, 2147483648
    %v1900 = vor.u32 1.1754944e-38, %v1899
    %v1901 = vsel %vm1898, %v1900, %v1896
    %v1902 = vmul.f32 1.0, %v1901
    %v1903 = vrcp.pop %v1887
    %v1904 = vmul.f32 %v1887, %v1903
    %v1905 = vsub.f32 1.0, %v1904
    %v1906 = vmul.f32 %v1903, %v1905
    %v1907 = vadd.f32 %v1903, %v1906
    %vm1908 = vweird.f32 %v1887
    %vm1909 = vweird.f32 %v1903
    %vm1910 = vmor %vm1908, %vm1909
    %v1911 = vsel %vm1910, %v1903, %v1907
    %v1912 = vand.u32 2147483647, %v1887
    %vm1913 = vcmp.eq.f32.partialorder %v1912, 8.507059e+37
    %v1914 = vand.u32 %v1887, 2147483648
    %v1915 = vor.u32 1.1754944e-38, %v1914
    %v1916 = vsel %vm1913, %v1915, %v1911
    %v1917 = vmul.f32 1.0, %v1916
    %vm1918 = vcmask 7168
    %1919 = vst.msk [vmem:[%s8] sm:$0xff] %vm1918, %v1902
    %1920 = vst.msk [vmem:[%s8 + $0x8] sm:$0xff] %vm1918, %v1917
    // Predicated region
    $region50: #{tpu_custom_call.1} parent=1 // pred_check
      _
    $region51: #{tpu_custom_call.1} parent=1 // pred_check_branch
      %1922 = sbr.rel (0) target = $region53
    $region52: #{tpu_custom_call.1} parent=1 // pred_region
      _
    $region53: #{tpu_custom_call.1} parent=1 // pred_fallthru
      _
    // Predicated region
    $region54: #{tpu_custom_call.1} parent=1 // pred_check
      _
    $region55: #{tpu_custom_call.1} parent=1 // pred_check_branch
      %1924 = sbr.rel (0) target = $region57
    $region56: #{tpu_custom_call.1} parent=1 // pred_region
      _
    $region57: #{tpu_custom_call.1} parent=1 // pred_fallthru
      _
    %1925 = vsyncpa [#allocation4], 1
    %1926 = vsyncpa [#allocation6], 1
    %1927 = vsyncpa [#allocation9], 1

</llo_original>
